<compile_context>
chip_gen: v7x
topology: tpu7x:2x2x1
jax: 0.10.0
libtpu: 0.0.40
codegen_flags: <defaults>
</compile_context>

<pallas_src>
import jax
import jax.numpy as jnp
from jax.experimental import pallas as pl
from jax.experimental.pallas import tpu as pltpu

# ---------------- configuration ----------------
IN_SHAPE = 30          # input / reconstruction width
L1 = 64                # encoder layer1 size (== decoder hidden size)
L2 = 32                # encoder layer2 size (bottleneck)
N_BATCHES = 2          # one-hot batch categories fed to the decoder
BN_EPS = 1e-5
LEAKY_SLOPE = 0.01

B_TOTAL = 256          # total batch rows (single kernel invocation, no grid)


# ---------------- Pallas kernel: fused encoder + decoder ----------------
def ae3_kernel(x_ref, bh_ref,
               w1_ref, w2_ref, wd1e_ref, wd1b_ref, wo_ref,
               bias_ref, out_ref):
    x = x_ref[...]                                              # (B, IN_SHAPE)

    # packed biases: row 0 = b1[:L1], row 1 = b2[:L2], row 2 = bd1[:L1], row 3 = bo[:IN_SHAPE]
    biases = bias_ref[...]                                      # (8, 128)
    b1 = biases[0:1, :L1]
    b2 = biases[1:2, :L2]
    bd1 = biases[2:3, :L1]
    bo = biases[3:4, :IN_SHAPE]

    # --- Encoder layer 1: Linear+BN (folded) -> (Dropout=id) -> LeakyReLU ---
    h = jnp.dot(x, w1_ref[...], preferred_element_type=jnp.float32) + b1
    h = jnp.where(h > 0, h, LEAKY_SLOPE * h)

    # --- Encoder layer 2 ---
    h = jnp.dot(h, w2_ref[...], preferred_element_type=jnp.float32) + b2
    enc = jnp.where(h > 0, h, LEAKY_SLOPE * h)                  # (B, L2)

    # --- Decoder layer 1 on cat([enc, batches_onehot], 1) ---
    # The concat is folded into a split contraction; both pieces run on the MXU
    # (K=32 and K=2 — plenty of slack, no cross-lane broadcasts needed).
    d = (jnp.dot(enc, wd1e_ref[...], preferred_element_type=jnp.float32)
         + jnp.dot(bh_ref[...], wd1b_ref[...], preferred_element_type=jnp.float32)
         + bd1)
    d = jnp.maximum(d, 0.0)                                     # ReLU

    # --- Decoder output layer (reconstruction, no activation) ---
    out_ref[...] = jnp.dot(d, wo_ref[...], preferred_element_type=jnp.float32) + bo


def autoencoder3_forward(x, batches_onehot, folded_params):
    """x: (B, IN_SHAPE) f32, batches_onehot: (B, N_BATCHES) f32.
    Returns reconstruction (B, IN_SHAPE)."""
    w1, w2, wd1e, wd1b, wo, bias_pack = folded_params
    B = x.shape[0]

    flops = 2 * B * (IN_SHAPE * L1 + L1 * L2 + L2 * L1 + N_BATCHES * L1 + L1 * IN_SHAPE)
    bytes_accessed = 4 * (x.size + batches_onehot.size + w1.size + w2.size
                          + wd1e.size + wd1b.size + wo.size + bias_pack.size
                          + B * IN_SHAPE)

    vmem_spec = pl.BlockSpec(memory_space=pltpu.MemorySpace.VMEM)
    return pl.pallas_call(
        ae3_kernel,
        out_shape=jax.ShapeDtypeStruct((B, IN_SHAPE), jnp.float32),
        in_specs=[vmem_spec] * 8,
        out_specs=vmem_spec,
        cost_estimate=pl.CostEstimate(flops=flops, transcendentals=0,
                                      bytes_accessed=bytes_accessed),
    )(x, batches_onehot, w1, w2, wd1e, wd1b, wo, bias_pack)


# ---------------- deterministic parameter construction ----------------
def xavier_uniform(key, fan_in, fan_out):
    a = jnp.sqrt(6.0 / (fan_in + fan_out))
    return jax.random.uniform(key, (fan_in, fan_out), jnp.float32, -a, a)


def make_bn(key, n):
    kg, kb, km, kv = jax.random.split(key, 4)
    gamma = 1.0 + 0.1 * jax.random.normal(kg, (n,), jnp.float32)
    beta = 0.1 * jax.random.normal(kb, (n,), jnp.float32)
    mean = 0.1 * jax.random.normal(km, (n,), jnp.float32)
    var = jnp.abs(1.0 + 0.1 * jax.random.normal(kv, (n,), jnp.float32))
    return gamma, beta, mean, var


def build_raw_params(key):
    k1, k2, k3, k4, kb1, kb2, kb3 = jax.random.split(key, 7)
    raw = {
        # encoder
        "w1": xavier_uniform(k1, IN_SHAPE, L1), "b1": jnp.zeros((L1,), jnp.float32),
        "bn1": make_bn(kb1, L1),
        "w2": xavier_uniform(k2, L1, L2), "b2": jnp.zeros((L2,), jnp.float32),
        "bn2": make_bn(kb2, L2),
        # decoder
        "wd1": xavier_uniform(k3, L2 + N_BATCHES, L1), "bd1": jnp.zeros((L1,), jnp.float32),
        "bnd1": make_bn(kb3, L1),
        "wo": xavier_uniform(k4, L1, IN_SHAPE), "bo": jnp.zeros((IN_SHAPE,), jnp.float32),
    }
    return raw


def fold_linear_bn(w, b, bn):
    gamma, beta, mean, var = bn
    s = gamma / jnp.sqrt(var + BN_EPS)
    t = beta - mean * s
    return w * s[None, :], b * s + t


def fold_params(raw):
    w1, b1 = fold_linear_bn(raw["w1"], raw["b1"], raw["bn1"])
    w2, b2 = fold_linear_bn(raw["w2"], raw["b2"], raw["bn2"])
    wd1, bd1 = fold_linear_bn(raw["wd1"], raw["bd1"], raw["bnd1"])
    wd1e, wd1b = wd1[:L2, :], wd1[L2:, :]
    wo, bo = raw["wo"], raw["bo"]

    # Pack all biases into a single (8,128) operand (each (1,n) bias would be
    # tile-padded to (8,128) anyway — this costs nothing and saves 3 DMAs).
    bias_pack = jnp.zeros((8, 128), jnp.float32)
    bias_pack = bias_pack.at[0, :L1].set(b1)
    bias_pack = bias_pack.at[1, :L2].set(b2)
    bias_pack = bias_pack.at[2, :L1].set(bd1)
    bias_pack = bias_pack.at[3, :IN_SHAPE].set(bo)

    return (w1, w2, wd1e, wd1b, wo, bias_pack)


# ---------------- pure-JAX reference (un-folded, for correctness) ----------------
def reference_forward(x, batches_onehot, raw):
    def bn_eval(h, bn):
        g, be, m, v = bn
        return g * (h - m) / jnp.sqrt(v + BN_EPS) + be

    h = x @ raw["w1"] + raw["b1"]
    h = bn_eval(h, raw["bn1"])
    h = jnp.where(h > 0, h, LEAKY_SLOPE * h)
    h = h @ raw["w2"] + raw["b2"]
    h = bn_eval(h, raw["bn2"])
    enc = jnp.where(h > 0, h, LEAKY_SLOPE * h)

    cat = jnp.concatenate([enc, batches_onehot], axis=1)
    d = cat @ raw["wd1"] + raw["bd1"]
    d = bn_eval(d, raw["bnd1"])
    d = jnp.maximum(d, 0.0)
    return d @ raw["wo"] + raw["bo"]


if __name__ == "__main__":
    key = jax.random.PRNGKey(0)
    kx, kb, kp = jax.random.split(key, 3)

    x = jax.random.normal(kx, (B_TOTAL, IN_SHAPE), jnp.float32)
    batch_idx = jax.random.randint(kb, (B_TOTAL,), 0, N_BATCHES)
    batches_onehot = jax.nn.one_hot(batch_idx, N_BATCHES, dtype=jnp.float32)

    raw = build_raw_params(kp)
    folded = fold_params(raw)

    out = autoencoder3_forward(x, batches_onehot, folded)
    out = jax.block_until_ready(out)

    ref = reference_forward(x, batches_onehot, raw)
    assert out.shape == (B_TOTAL, IN_SHAPE)
    assert jnp.allclose(out, ref, atol=2e-3, rtol=2e-3), "mismatch vs reference"

    print("KERNEL_OK")
</pallas_src>

<mosaic_0001>
module attributes {stable_mosaic.version = 11 : i64} {
  func.func @ae3_kernel(%arg0: memref<256x30xf32, #tpu.memory_space<vmem>>, %arg1: memref<256x2xf32, #tpu.memory_space<vmem>>, %arg2: memref<30x64xf32, #tpu.memory_space<vmem>>, %arg3: memref<64x32xf32, #tpu.memory_space<vmem>>, %arg4: memref<32x64xf32, #tpu.memory_space<vmem>>, %arg5: memref<2x64xf32, #tpu.memory_space<vmem>>, %arg6: memref<64x30xf32, #tpu.memory_space<vmem>>, %arg7: memref<8x128xf32, #tpu.memory_space<vmem>>, %arg8: memref<256x30xf32, #tpu.memory_space<vmem>>) attributes {dimension_semantics = [], scalar_prefetch = 0 : i64, scratch_operands = 0 : i64, tpu.core_type = #tpu.core_type<tc>} {
    %c0 = arith.constant 0 : index
    %c0_0 = arith.constant 0 : index
    %0 = vector.load %arg0[%c0, %c0_0] : memref<256x30xf32, #tpu.memory_space<vmem>>, vector<256x30xf32>
    %c0_1 = arith.constant 0 : index
    %c0_2 = arith.constant 0 : index
    %1 = vector.load %arg7[%c0_1, %c0_2] : memref<8x128xf32, #tpu.memory_space<vmem>>, vector<8x128xf32>
    %2 = vector.extract_strided_slice %1 {offsets = [0, 0], sizes = [1, 64], strides = [1, 1]} : vector<8x128xf32> to vector<1x64xf32>
    %3 = vector.extract_strided_slice %1 {offsets = [1, 0], sizes = [1, 32], strides = [1, 1]} : vector<8x128xf32> to vector<1x32xf32>
    %4 = vector.extract_strided_slice %1 {offsets = [2, 0], sizes = [1, 64], strides = [1, 1]} : vector<8x128xf32> to vector<1x64xf32>
    %5 = vector.extract_strided_slice %1 {offsets = [3, 0], sizes = [1, 30], strides = [1, 1]} : vector<8x128xf32> to vector<1x30xf32>
    %c0_3 = arith.constant 0 : index
    %c0_4 = arith.constant 0 : index
    %6 = vector.load %arg2[%c0_3, %c0_4] : memref<30x64xf32, #tpu.memory_space<vmem>>, vector<30x64xf32>
    %cst = arith.constant dense<0.000000e+00> : vector<256x64xf32>
    %7 = tpu.matmul %0, %6, %cst {dimension_numbers = #tpu.dot_dimension_numbers<[1], [0], [0], [1], [0, 0, 1, 1], [], []>} : vector<256x30xf32>, vector<30x64xf32>, vector<256x64xf32> -> vector<256x64xf32>
    %8 = vector.broadcast %2 : vector<1x64xf32> to vector<256x64xf32>
    %9 = arith.addf %7, %8 : vector<256x64xf32>
    %cst_5 = arith.constant 0.000000e+00 : f32
    %10 = vector.broadcast %cst_5 : f32 to vector<256x64xf32>
    %11 = arith.cmpf ogt, %9, %10 : vector<256x64xf32>
    %cst_6 = arith.constant 0.00999999977 : f32
    %12 = vector.broadcast %cst_6 : f32 to vector<256x64xf32>
    %13 = arith.mulf %12, %9 : vector<256x64xf32>
    %14 = arith.select %11, %9, %13 : vector<256x64xi1>, vector<256x64xf32>
    %c0_7 = arith.constant 0 : index
    %c0_8 = arith.constant 0 : index
    %15 = vector.load %arg3[%c0_7, %c0_8] : memref<64x32xf32, #tpu.memory_space<vmem>>, vector<64x32xf32>
    %cst_9 = arith.constant dense<0.000000e+00> : vector<256x32xf32>
    %16 = tpu.matmul %14, %15, %cst_9 {dimension_numbers = #tpu.dot_dimension_numbers<[1], [0], [0], [1], [0, 0, 1, 1], [], []>} : vector<256x64xf32>, vector<64x32xf32>, vector<256x32xf32> -> vector<256x32xf32>
    %17 = vector.broadcast %3 : vector<1x32xf32> to vector<256x32xf32>
    %18 = arith.addf %16, %17 : vector<256x32xf32>
    %cst_10 = arith.constant 0.000000e+00 : f32
    %19 = vector.broadcast %cst_10 : f32 to vector<256x32xf32>
    %20 = arith.cmpf ogt, %18, %19 : vector<256x32xf32>
    %cst_11 = arith.constant 0.00999999977 : f32
    %21 = vector.broadcast %cst_11 : f32 to vector<256x32xf32>
    %22 = arith.mulf %21, %18 : vector<256x32xf32>
    %23 = arith.select %20, %18, %22 : vector<256x32xi1>, vector<256x32xf32>
    %c0_12 = arith.constant 0 : index
    %c0_13 = arith.constant 0 : index
    %24 = vector.load %arg4[%c0_12, %c0_13] : memref<32x64xf32, #tpu.memory_space<vmem>>, vector<32x64xf32>
    %cst_14 = arith.constant dense<0.000000e+00> : vector<256x64xf32>
    %25 = tpu.matmul %23, %24, %cst_14 {dimension_numbers = #tpu.dot_dimension_numbers<[1], [0], [0], [1], [0, 0, 1, 1], [], []>} : vector<256x32xf32>, vector<32x64xf32>, vector<256x64xf32> -> vector<256x64xf32>
    %c0_15 = arith.constant 0 : index
    %c0_16 = arith.constant 0 : index
    %26 = vector.load %arg1[%c0_15, %c0_16] : memref<256x2xf32, #tpu.memory_space<vmem>>, vector<256x2xf32>
    %c0_17 = arith.constant 0 : index
    %c0_18 = arith.constant 0 : index
    %27 = vector.load %arg5[%c0_17, %c0_18] : memref<2x64xf32, #tpu.memory_space<vmem>>, vector<2x64xf32>
    %cst_19 = arith.constant dense<0.000000e+00> : vector<256x64xf32>
    %28 = tpu.matmul %26, %27, %cst_19 {dimension_numbers = #tpu.dot_dimension_numbers<[1], [0], [0], [1], [0, 0, 1, 1], [], []>} : vector<256x2xf32>, vector<2x64xf32>, vector<256x64xf32> -> vector<256x64xf32>
    %29 = arith.addf %25, %28 : vector<256x64xf32>
    %30 = vector.broadcast %4 : vector<1x64xf32> to vector<256x64xf32>
    %31 = arith.addf %29, %30 : vector<256x64xf32>
    %cst_20 = arith.constant 0.000000e+00 : f32
    %32 = vector.broadcast %cst_20 : f32 to vector<256x64xf32>
    %33 = arith.maximumf %31, %32 : vector<256x64xf32>
    %c0_21 = arith.constant 0 : index
    %c0_22 = arith.constant 0 : index
    %34 = vector.load %arg6[%c0_21, %c0_22] : memref<64x30xf32, #tpu.memory_space<vmem>>, vector<64x30xf32>
    %cst_23 = arith.constant dense<0.000000e+00> : vector<256x30xf32>
    %35 = tpu.matmul %33, %34, %cst_23 {dimension_numbers = #tpu.dot_dimension_numbers<[1], [0], [0], [1], [0, 0, 1, 1], [], []>} : vector<256x64xf32>, vector<64x30xf32>, vector<256x30xf32> -> vector<256x30xf32>
    %36 = vector.broadcast %5 : vector<1x30xf32> to vector<256x30xf32>
    %37 = arith.addf %35, %36 : vector<256x30xf32>
    %c0_24 = arith.constant 0 : index
    %c0_25 = arith.constant 0 : index
    %38 = vector.load %arg8[%c0_24, %c0_25] : memref<256x30xf32, #tpu.memory_space<vmem>>, vector<256x30xf32>
    tpu.vector_store %arg8[%c0_24, %c0_25], %37 {strides = array<i32>} : memref<256x30xf32, #tpu.memory_space<vmem>>, vector<256x30xf32>,
    return
  }
}

</mosaic_0001>

<llo_original>
// kernel: tpu_custom_call.1
$region0: #{tpu_custom_call.1}
  #allocation0 [shape = 'u32[]', space=smem, size = 0x4, offset = 0x4, fixed_abs, tag = 'smem constant byte address 0x4 - core index']
  #allocation1 [shape = 'u32[144,128]{1,0:T(1,128)}', space=vmem, size = 0x12000, scoped, tag = 'internal scratch']
  %s0 = inlined_call_operand.vmem [shape: f32[256,30], index: 0, kind: input, shape index: {}]
  %s1 = inlined_call_operand.vmem [shape: f32[256,2], index: 1, kind: input, shape index: {}]
  %s2 = inlined_call_operand.vmem [shape: f32[30,64], index: 2, kind: input, shape index: {}]
  %s3 = inlined_call_operand.vmem [shape: f32[64,32], index: 3, kind: input, shape index: {}]
  %s4 = inlined_call_operand.vmem [shape: f32[32,64], index: 4, kind: input, shape index: {}]
  %s5 = inlined_call_operand.vmem [shape: f32[2,64], index: 5, kind: input, shape index: {}]
  %s6 = inlined_call_operand.vmem [shape: f32[64,30], index: 6, kind: input, shape index: {}]
  %s7 = inlined_call_operand.vmem [shape: f32[8,128], index: 7, kind: input, shape index: {}]
  %s8 = inlined_call_operand.vmem [shape: f32[256,30], index: 8, kind: output, shape index: {}]
  %s9 = sld [smem:[#allocation0]]
  $region42: #{tpu_custom_call.1} parent=0
    _
  %s11 = ssub.s32 1, %s9
  %s12 = scalar_select 0, %s11, %s9
  // Predicated region
  $region2: #{tpu_custom_call.1} parent=0 // pred_check
    _
  $region3: #{tpu_custom_call.1} parent=0 // pred_check_branch
    %14 = sbr.rel (0) target = $region5
  $region4: #{tpu_custom_call.1} parent=0 // pred_region
    _
  $region5: #{tpu_custom_call.1} parent=0 // pred_fallthru
    _
  // Predicated region
  $region6: #{tpu_custom_call.1} parent=0 // pred_check
    _
  $region7: #{tpu_custom_call.1} parent=0 // pred_check_branch
    %16 = sbr.rel (0) target = $region9
  $region8: #{tpu_custom_call.1} parent=0 // pred_region
    _
  $region9: #{tpu_custom_call.1} parent=0 // pred_fallthru
    _
  // Predicated region
  $region10: #{tpu_custom_call.1} parent=0 // pred_check
    _
  $region11: #{tpu_custom_call.1} parent=0 // pred_check_branch
    %18 = sbr.rel (0) target = $region13
  $region12: #{tpu_custom_call.1} parent=0 // pred_region
    _
  $region13: #{tpu_custom_call.1} parent=0 // pred_fallthru
    _
  // Predicated region
  $region14: #{tpu_custom_call.1} parent=0 // pred_check
    _
  $region15: #{tpu_custom_call.1} parent=0 // pred_check_branch
    %20 = sbr.rel (0) target = $region17
  $region16: #{tpu_custom_call.1} parent=0 // pred_region
    _
  $region17: #{tpu_custom_call.1} parent=0 // pred_fallthru
    _
  // Predicated region
  $region18: #{tpu_custom_call.1} parent=0 // pred_check
    _
  $region19: #{tpu_custom_call.1} parent=0 // pred_check_branch
    %22 = sbr.rel (0) target = $region21
  $region20: #{tpu_custom_call.1} parent=0 // pred_region
    _
  $region21: #{tpu_custom_call.1} parent=0 // pred_fallthru
    _
  // Predicated region
  $region22: #{tpu_custom_call.1} parent=0 // pred_check
    _
  $region23: #{tpu_custom_call.1} parent=0 // pred_check_branch
    %24 = sbr.rel (0) target = $region25
  $region24: #{tpu_custom_call.1} parent=0 // pred_region
    _
  $region25: #{tpu_custom_call.1} parent=0 // pred_fallthru
    _
  // Predicated region
  $region26: #{tpu_custom_call.1} parent=0 // pred_check
    _
  $region27: #{tpu_custom_call.1} parent=0 // pred_check_branch
    %26 = sbr.rel (0) target = $region29
  $region28: #{tpu_custom_call.1} parent=0 // pred_region
    _
  $region29: #{tpu_custom_call.1} parent=0 // pred_fallthru
    _
  // Predicated region
  $region30: #{tpu_custom_call.1} parent=0 // pred_check
    _
  $region31: #{tpu_custom_call.1} parent=0 // pred_check_branch
    %28 = sbr.rel (0) target = $region33
  $region32: #{tpu_custom_call.1} parent=0 // pred_region
    _
  $region33: #{tpu_custom_call.1} parent=0 // pred_fallthru
    _
  %v29 = vld [vmem:[%s0] sm:$0xff]
  %v30 = vld [vmem:[%s0 + $0x8] sm:$0xff]
  %v31 = vld [vmem:[%s0 + $0x10] sm:$0xff]
  %v32 = vld [vmem:[%s0 + $0x18] sm:$0xff]
  %v33 = vld [vmem:[%s0 + $0x20] sm:$0xff]
  %v34 = vld [vmem:[%s0 + $0x28] sm:$0xff]
  %v35 = vld [vmem:[%s0 + $0x30] sm:$0xff]
  %v36 = vld [vmem:[%s0 + $0x38] sm:$0xff]
  %v37 = vld [vmem:[%s0 + $0x40] sm:$0xff]
  %v38 = vld [vmem:[%s0 + $0x48] sm:$0xff]
  %v39 = vld [vmem:[%s0 + $0x50] sm:$0xff]
  %v40 = vld [vmem:[%s0 + $0x58] sm:$0xff]
  %v41 = vld [vmem:[%s0 + $0x60] sm:$0xff]
  %v42 = vld [vmem:[%s0 + $0x68] sm:$0xff]
  %v43 = vld [vmem:[%s0 + $0x70] sm:$0xff]
  %v44 = vld [vmem:[%s0 + $0x78] sm:$0xff]
  %v45 = vld [vmem:[%s0 + $0x80] sm:$0xff]
  %v46 = vld [vmem:[%s0 + $0x88] sm:$0xff]
  %v47 = vld [vmem:[%s0 + $0x90] sm:$0xff]
  %v48 = vld [vmem:[%s0 + $0x98] sm:$0xff]
  %v49 = vld [vmem:[%s0 + $0xa0] sm:$0xff]
  %v50 = vld [vmem:[%s0 + $0xa8] sm:$0xff]
  %v51 = vld [vmem:[%s0 + $0xb0] sm:$0xff]
  %v52 = vld [vmem:[%s0 + $0xb8] sm:$0xff]
  %v53 = vld [vmem:[%s0 + $0xc0] sm:$0xff]
  %v54 = vld [vmem:[%s0 + $0xc8] sm:$0xff]
  %v55 = vld [vmem:[%s0 + $0xd0] sm:$0xff]
  %v56 = vld [vmem:[%s0 + $0xd8] sm:$0xff]
  %v57 = vld [vmem:[%s0 + $0xe0] sm:$0xff]
  %v58 = vld [vmem:[%s0 + $0xe8] sm:$0xff]
  %v59 = vld [vmem:[%s0 + $0xf0] sm:$0xff]
  %v60 = vld [vmem:[%s0 + $0xf8] sm:$0xff]
  %v61 = vld [vmem:[%s7] sm:$0xff]
  %v62 = vld [vmem:[%s2] sm:$0xff]
  %v63 = vld [vmem:[%s2 + $0x8] sm:$0xff]
  %v64 = vld [vmem:[%s2 + $0x10] sm:$0xff]
  %v65 = vld [vmem:[%s2 + $0x18] sm:$0x3f]
  %v66 = vlaneseq
  %v67 = vshrl.u32 %v66, 7
  %v68 = vsub.s32 0, %v67
  %v69 = vrot.slane %v61, %v68
  %vm70 = vcmask 244736
  %v72 = vsel %vm70, %v29, 0
  %v75 = vsel %vm70, %v30, 0
  %v78 = vsel %vm70, %v31, 0
  %v81 = vsel %vm70, %v32, 0
  %v84 = vsel %vm70, %v33, 0
  %v87 = vsel %vm70, %v34, 0
  %v90 = vsel %vm70, %v35, 0
  %v93 = vsel %vm70, %v36, 0
  %v96 = vsel %vm70, %v37, 0
  %v99 = vsel %vm70, %v38, 0
  %v102 = vsel %vm70, %v39, 0
  %v105 = vsel %vm70, %v40, 0
  %v108 = vsel %vm70, %v41, 0
  %v111 = vsel %vm70, %v42, 0
  %v114 = vsel %vm70, %v43, 0
  %v117 = vsel %vm70, %v44, 0
  %v120 = vsel %vm70, %v45, 0
  %v123 = vsel %vm70, %v46, 0
  %v126 = vsel %vm70, %v47, 0
  %v129 = vsel %vm70, %v48, 0
  %v132 = vsel %vm70, %v49, 0
  %v135 = vsel %vm70, %v50, 0
  %v138 = vsel %vm70, %v51, 0
  %v141 = vsel %vm70, %v52, 0
  %v144 = vsel %vm70, %v53, 0
  %v147 = vsel %vm70, %v54, 0
  %v150 = vsel %vm70, %v55, 0
  %v153 = vsel %vm70, %v56, 0
  %v156 = vsel %vm70, %v57, 0
  %v159 = vsel %vm70, %v58, 0
  %v162 = vsel %vm70, %v59, 0
  %v165 = vsel %vm70, %v60, 0
  %vm167 = vcmask 1045504
  %v169 = vsel %vm167, %v65, 0
  %171 = vmatprep.subr.mxu0 0.0
  %172 = vmatpush1.msra.mxu0 %v62
  %173 = vmatprep.subr.mxu0 0.0
  %174 = vmatpush1.msra.mxu0 %v63
  %175 = vmatprep.subr.mxu0 0.0
  %176 = vmatpush1.msra.mxu0 %v64
  %177 = vmatprep.subr.mxu0 0.0
  %178 = vmatpush1.msra.mxu0 %v169
  %179 = vmatprep.subr.mxu0 0.0
  %180 = vmatpush1.msra.mxu0 0.0
  %181 = vmatprep.subr.mxu0 0.0
  %182 = vmatpush1.msra.mxu0 0.0
  %183 = vmatprep.subr.mxu0 0.0
  %184 = vmatpush1.msra.mxu0 0.0
  %185 = vmatprep.subr.mxu0 0.0
  %186 = vmatpush1.msra.mxu0 0.0
  %187 = vmatprep.subr.mxu0 0.0
  %188 = vmatpush1.msra.mxu0 0.0
  %189 = vmatprep.subr.mxu0 0.0
  %190 = vmatpush1.msra.mxu0 0.0
  %191 = vmatprep.subr.mxu0 0.0
  %192 = vmatpush1.msra.mxu0 0.0
  %193 = vmatprep.subr.mxu0 0.0
  %194 = vmatpush1.msra.mxu0 0.0
  %195 = vmatprep.subr.mxu0 0.0
  %196 = vmatpush1.msra.mxu0 0.0
  %197 = vmatprep.subr.mxu0 0.0
  %198 = vmatpush1.msra.mxu0 0.0
  %199 = vmatprep.subr.mxu0 0.0
  %200 = vmatpush1.msra.mxu0 0.0
  %201 = vmatprep.subr.mxu0 0.0
  %202 = vmatpush1.msra.mxu0 0.0
  %203 = vmatprep.subr.mxu0 0.0
  %204 = vmatpush1.msra.mxu0 0.0
  %205 = vmatprep.subr.mxu0 0.0
  %206 = vmatpush1.msra.mxu0 0.0
  %207 = vmatprep.subr.mxu0 0.0
  %208 = vmatpush1.msra.mxu0 0.0
  %209 = vmatprep.subr.mxu0 0.0
  %210 = vmatpush1.msra.mxu0 0.0
  %211 = vmatprep.subr.mxu0 0.0
  %212 = vmatpush1.msra.mxu0 0.0
  %213 = vmatprep.subr.mxu0 0.0
  %214 = vmatpush1.msra.mxu0 0.0
  %215 = vmatprep.subr.mxu0 0.0
  %216 = vmatpush1.msra.mxu0 0.0
  %217 = vmatprep.subr.mxu0 0.0
  %218 = vmatpush1.msra.mxu0 0.0
  %219 = vmatprep.subr.mxu0 0.0
  %220 = vmatpush1.msra.mxu0 0.0
  %221 = vmatprep.subr.mxu0 0.0
  %222 = vmatpush1.msra.mxu0 0.0
  %223 = vmatprep.subr.mxu0 0.0
  %224 = vmatpush1.msra.mxu0 0.0
  %225 = vmatprep.subr.mxu0 0.0
  %226 = vmatpush1.msra.mxu0 0.0
  %227 = vmatprep.subr.mxu0 0.0
  %228 = vmatpush1.msra.mxu0 0.0
  %229 = vmatprep.subr.mxu0 0.0
  %230 = vmatpush1.msra.mxu0 0.0
  %231 = vmatprep.subr.mxu0 0.0
  %232 = vmatpush1.msra.mxu0 0.0
  %233 = vmatprep.subr.mxu0 0.0
  %234 = vmatpush1.msra.mxu0 0.0
  %235 = vmatprep.mubr.f32.mxu0 0.0
  %236 = vmatmul.mubr.f32.gmra.mrb[0].mxu0 %v72
  %v237 = vpop.f32.mrb[0].mxu0
  %v238 = vadd.f32 %v69, %v237
  %v239 = vpop.f32.mrb[0].mxu0
  %240 = vmatprep.mubr.f32.mxu0 0.0
  %241 = vmatmul.mubr.f32.gmra.mrb[0].mxu0 %v75
  %v242 = vpop.f32.mrb[0].mxu0
  %v243 = vadd.f32 %v69, %v242
  %v244 = vpop.f32.mrb[0].mxu0
  %245 = vmatprep.mubr.f32.mxu0 0.0
  %246 = vmatmul.mubr.f32.gmra.mrb[0].mxu0 %v78
  %v247 = vpop.f32.mrb[0].mxu0
  %v248 = vadd.f32 %v69, %v247
  %v249 = vpop.f32.mrb[0].mxu0
  %250 = vmatprep.mubr.f32.mxu0 0.0
  %251 = vmatmul.mubr.f32.gmra.mrb[0].mxu0 %v81
  %v252 = vpop.f32.mrb[0].mxu0
  %v253 = vadd.f32 %v69, %v252
  %v254 = vpop.f32.mrb[0].mxu0
  %255 = vmatprep.mubr.f32.mxu0 0.0
  %256 = vmatmul.mubr.f32.gmra.mrb[0].mxu0 %v84
  %v257 = vpop.f32.mrb[0].mxu0
  %v258 = vadd.f32 %v69, %v257
  %v259 = vpop.f32.mrb[0].mxu0
  %260 = vmatprep.mubr.f32.mxu0 0.0
  %261 = vmatmul.mubr.f32.gmra.mrb[0].mxu0 %v87
  %v262 = vpop.f32.mrb[0].mxu0
  %v263 = vadd.f32 %v69, %v262
  %v264 = vpop.f32.mrb[0].mxu0
  %265 = vmatprep.mubr.f32.mxu0 0.0
  %266 = vmatmul.mubr.f32.gmra.mrb[0].mxu0 %v90
  %v267 = vpop.f32.mrb[0].mxu0
  %v268 = vadd.f32 %v69, %v267
  %v269 = vpop.f32.mrb[0].mxu0
  %270 = vmatprep.mubr.f32.mxu0 0.0
  %271 = vmatmul.mubr.f32.gmra.mrb[0].mxu0 %v93
  %v272 = vpop.f32.mrb[0].mxu0
  %v273 = vadd.f32 %v69, %v272
  %v274 = vpop.f32.mrb[0].mxu0
  %275 = vmatprep.mubr.f32.mxu0 0.0
  %276 = vmatmul.mubr.f32.gmra.mrb[0].mxu0 %v96
  %v277 = vpop.f32.mrb[0].mxu0
  %v278 = vadd.f32 %v69, %v277
  %v279 = vpop.f32.mrb[0].mxu0
  %280 = vmatprep.mubr.f32.mxu0 0.0
  %281 = vmatmul.mubr.f32.gmra.mrb[0].mxu0 %v99
  %v282 = vpop.f32.mrb[0].mxu0
  %v283 = vadd.f32 %v69, %v282
  %v284 = vpop.f32.mrb[0].mxu0
  %285 = vmatprep.mubr.f32.mxu0 0.0
  %286 = vmatmul.mubr.f32.gmra.mrb[0].mxu0 %v102
  %v287 = vpop.f32.mrb[0].mxu0
  %v288 = vadd.f32 %v69, %v287
  %v289 = vpop.f32.mrb[0].mxu0
  %290 = vmatprep.mubr.f32.mxu0 0.0
  %291 = vmatmul.mubr.f32.gmra.mrb[0].mxu0 %v105
  %v292 = vpop.f32.mrb[0].mxu0
  %v293 = vadd.f32 %v69, %v292
  %v294 = vpop.f32.mrb[0].mxu0
  %295 = vmatprep.mubr.f32.mxu0 0.0
  %296 = vmatmul.mubr.f32.gmra.mrb[0].mxu0 %v108
  %v297 = vpop.f32.mrb[0].mxu0
  %v298 = vadd.f32 %v69, %v297
  %v299 = vpop.f32.mrb[0].mxu0
  %300 = vmatprep.mubr.f32.mxu0 0.0
  %301 = vmatmul.mubr.f32.gmra.mrb[0].mxu0 %v111
  %v302 = vpop.f32.mrb[0].mxu0
  %v303 = vadd.f32 %v69, %v302
  %v304 = vpop.f32.mrb[0].mxu0
  %305 = vmatprep.mubr.f32.mxu0 0.0
  %306 = vmatmul.mubr.f32.gmra.mrb[0].mxu0 %v114
  %v307 = vpop.f32.mrb[0].mxu0
  %v308 = vadd.f32 %v69, %v307
  %v309 = vpop.f32.mrb[0].mxu0
  %310 = vmatprep.mubr.f32.mxu0 0.0
  %311 = vmatmul.mubr.f32.gmra.mrb[0].mxu0 %v117
  %v312 = vpop.f32.mrb[0].mxu0
  %v313 = vadd.f32 %v69, %v312
  %v314 = vpop.f32.mrb[0].mxu0
  %315 = vmatprep.mubr.f32.mxu0 0.0
  %316 = vmatmul.mubr.f32.gmra.mrb[0].mxu0 %v120
  %v317 = vpop.f32.mrb[0].mxu0
  %v318 = vadd.f32 %v69, %v317
  %v319 = vpop.f32.mrb[0].mxu0
  %320 = vmatprep.mubr.f32.mxu0 0.0
  %321 = vmatmul.mubr.f32.gmra.mrb[0].mxu0 %v123
  %v322 = vpop.f32.mrb[0].mxu0
  %v323 = vadd.f32 %v69, %v322
  %v324 = vpop.f32.mrb[0].mxu0
  %325 = vmatprep.mubr.f32.mxu0 0.0
  %326 = vmatmul.mubr.f32.gmra.mrb[0].mxu0 %v126
  %v327 = vpop.f32.mrb[0].mxu0
  %v328 = vadd.f32 %v69, %v327
  %v329 = vpop.f32.mrb[0].mxu0
  %330 = vmatprep.mubr.f32.mxu0 0.0
  %331 = vmatmul.mubr.f32.gmra.mrb[0].mxu0 %v129
  %v332 = vpop.f32.mrb[0].mxu0
  %v333 = vadd.f32 %v69, %v332
  %v334 = vpop.f32.mrb[0].mxu0
  %335 = vmatprep.mubr.f32.mxu0 0.0
  %336 = vmatmul.mubr.f32.gmra.mrb[0].mxu0 %v132
  %v337 = vpop.f32.mrb[0].mxu0
  %v338 = vadd.f32 %v69, %v337
  %v339 = vpop.f32.mrb[0].mxu0
  %340 = vmatprep.mubr.f32.mxu0 0.0
  %341 = vmatmul.mubr.f32.gmra.mrb[0].mxu0 %v135
  %v342 = vpop.f32.mrb[0].mxu0
  %v343 = vadd.f32 %v69, %v342
  %v344 = vpop.f32.mrb[0].mxu0
  %345 = vmatprep.mubr.f32.mxu0 0.0
  %346 = vmatmul.mubr.f32.gmra.mrb[0].mxu0 %v138
  %v347 = vpop.f32.mrb[0].mxu0
  %v348 = vadd.f32 %v69, %v347
  %v349 = vpop.f32.mrb[0].mxu0
  %350 = vmatprep.mubr.f32.mxu0 0.0
  %351 = vmatmul.mubr.f32.gmra.mrb[0].mxu0 %v141
  %v352 = vpop.f32.mrb[0].mxu0
  %v353 = vadd.f32 %v69, %v352
  %v354 = vpop.f32.mrb[0].mxu0
  %355 = vmatprep.mubr.f32.mxu0 0.0
  %356 = vmatmul.mubr.f32.gmra.mrb[0].mxu0 %v144
  %v357 = vpop.f32.mrb[0].mxu0
  %v358 = vadd.f32 %v69, %v357
  %v359 = vpop.f32.mrb[0].mxu0
  %360 = vmatprep.mubr.f32.mxu0 0.0
  %361 = vmatmul.mubr.f32.gmra.mrb[0].mxu0 %v147
  %v362 = vpop.f32.mrb[0].mxu0
  %v363 = vadd.f32 %v69, %v362
  %v364 = vpop.f32.mrb[0].mxu0
  %365 = vmatprep.mubr.f32.mxu0 0.0
  %366 = vmatmul.mubr.f32.gmra.mrb[0].mxu0 %v150
  %v367 = vpop.f32.mrb[0].mxu0
  %v368 = vadd.f32 %v69, %v367
  %v369 = vpop.f32.mrb[0].mxu0
  %370 = vmatprep.mubr.f32.mxu0 0.0
  %371 = vmatmul.mubr.f32.gmra.mrb[0].mxu0 %v153
  %v372 = vpop.f32.mrb[0].mxu0
  %v373 = vadd.f32 %v69, %v372
  %v374 = vpop.f32.mrb[0].mxu0
  %375 = vmatprep.mubr.f32.mxu0 0.0
  %376 = vmatmul.mubr.f32.gmra.mrb[0].mxu0 %v156
  %v377 = vpop.f32.mrb[0].mxu0
  %v378 = vadd.f32 %v69, %v377
  %v379 = vpop.f32.mrb[0].mxu0
  %380 = vmatprep.mubr.f32.mxu0 0.0
  %381 = vmatmul.mubr.f32.gmra.mrb[0].mxu0 %v159
  %v382 = vpop.f32.mrb[0].mxu0
  %v383 = vadd.f32 %v69, %v382
  %v384 = vpop.f32.mrb[0].mxu0
  %385 = vmatprep.mubr.f32.mxu0 0.0
  %386 = vmatmul.mubr.f32.gmra.mrb[0].mxu0 %v162
  %v387 = vpop.f32.mrb[0].mxu0
  %v388 = vadd.f32 %v69, %v387
  %v389 = vpop.f32.mrb[0].mxu0
  %390 = vmatprep.mubr.f32.mxu0 0.0
  %391 = vmatmul.mubr.f32.gmra.mrb[0].mxu0 %v165
  %v392 = vpop.f32.mrb[0].mxu0
  %v393 = vadd.f32 %v69, %v392
  %v394 = vpop.f32.mrb[0].mxu0
  %395 = vdwg.mxu0
  %vm396 = vcmp.gt.f32.partialorder %v238, 0.0
  %vm397 = vcmp.gt.f32.partialorder %v243, 0.0
  %vm398 = vcmp.gt.f32.partialorder %v248, 0.0
  %vm399 = vcmp.gt.f32.partialorder %v253, 0.0
  %vm400 = vcmp.gt.f32.partialorder %v258, 0.0
  %vm401 = vcmp.gt.f32.partialorder %v263, 0.0
  %vm402 = vcmp.gt.f32.partialorder %v268, 0.0
  %vm403 = vcmp.gt.f32.partialorder %v273, 0.0
  %vm404 = vcmp.gt.f32.partialorder %v278, 0.0
  %vm405 = vcmp.gt.f32.partialorder %v283, 0.0
  %vm406 = vcmp.gt.f32.partialorder %v288, 0.0
  %vm407 = vcmp.gt.f32.partialorder %v293, 0.0
  %vm408 = vcmp.gt.f32.partialorder %v298, 0.0
  %vm409 = vcmp.gt.f32.partialorder %v303, 0.0
  %vm410 = vcmp.gt.f32.partialorder %v308, 0.0
  %vm411 = vcmp.gt.f32.partialorder %v313, 0.0
  %vm412 = vcmp.gt.f32.partialorder %v318, 0.0
  %vm413 = vcmp.gt.f32.partialorder %v323, 0.0
  %vm414 = vcmp.gt.f32.partialorder %v328, 0.0
  %vm415 = vcmp.gt.f32.partialorder %v333, 0.0
  %vm416 = vcmp.gt.f32.partialorder %v338, 0.0
  %vm417 = vcmp.gt.f32.partialorder %v343, 0.0
  %vm418 = vcmp.gt.f32.partialorder %v348, 0.0
  %vm419 = vcmp.gt.f32.partialorder %v353, 0.0
  %vm420 = vcmp.gt.f32.partialorder %v358, 0.0
  %vm421 = vcmp.gt.f32.partialorder %v363, 0.0
  %vm422 = vcmp.gt.f32.partialorder %v368, 0.0
  %vm423 = vcmp.gt.f32.partialorder %v373, 0.0
  %vm424 = vcmp.gt.f32.partialorder %v378, 0.0
  %vm425 = vcmp.gt.f32.partialorder %v383, 0.0
  %vm426 = vcmp.gt.f32.partialorder %v388, 0.0
  %vm427 = vcmp.gt.f32.partialorder %v393, 0.0
  %v428 = vmul.f32 %v238, 0.01
  %v429 = vmul.f32 %v243, 0.01
  %v430 = vmul.f32 %v248, 0.01
  %v431 = vmul.f32 %v253, 0.01
  %v432 = vmul.f32 %v258, 0.01
  %v433 = vmul.f32 %v263, 0.01
  %v434 = vmul.f32 %v268, 0.01
  %v435 = vmul.f32 %v273, 0.01
  %v436 = vmul.f32 %v278, 0.01
  %v437 = vmul.f32 %v283, 0.01
  %v438 = vmul.f32 %v288, 0.01
  %v439 = vmul.f32 %v293, 0.01
  %v440 = vmul.f32 %v298, 0.01
  %v441 = vmul.f32 %v303, 0.01
  %v442 = vmul.f32 %v308, 0.01
  %v443 = vmul.f32 %v313, 0.01
  %v444 = vmul.f32 %v318, 0.01
  %v445 = vmul.f32 %v323, 0.01
  %v446 = vmul.f32 %v328, 0.01
  %v447 = vmul.f32 %v333, 0.01
  %v448 = vmul.f32 %v338, 0.01
  %v449 = vmul.f32 %v343, 0.01
  %v450 = vmul.f32 %v348, 0.01
  %v451 = vmul.f32 %v353, 0.01
  %v452 = vmul.f32 %v358, 0.01
  %v453 = vmul.f32 %v363, 0.01
  %v454 = vmul.f32 %v368, 0.01
  %v455 = vmul.f32 %v373, 0.01
  %v456 = vmul.f32 %v378, 0.01
  %v457 = vmul.f32 %v383, 0.01
  %v458 = vmul.f32 %v388, 0.01
  %v459 = vmul.f32 %v393, 0.01
  %v460 = vsel %vm396, %v238, %v428
  %v461 = vsel %vm397, %v243, %v429
  %v462 = vsel %vm398, %v248, %v430
  %v463 = vsel %vm399, %v253, %v431
  %v464 = vsel %vm400, %v258, %v432
  %v465 = vsel %vm401, %v263, %v433
  %v466 = vsel %vm402, %v268, %v434
  %v467 = vsel %vm403, %v273, %v435
  %v468 = vsel %vm404, %v278, %v436
  %v469 = vsel %vm405, %v283, %v437
  %v470 = vsel %vm406, %v288, %v438
  %v471 = vsel %vm407, %v293, %v439
  %v472 = vsel %vm408, %v298, %v440
  %v473 = vsel %vm409, %v303, %v441
  %v474 = vsel %vm410, %v308, %v442
  %v475 = vsel %vm411, %v313, %v443
  %v476 = vsel %vm412, %v318, %v444
  %v477 = vsel %vm413, %v323, %v445
  %v478 = vsel %vm414, %v328, %v446
  %v479 = vsel %vm415, %v333, %v447
  %v480 = vsel %vm416, %v338, %v448
  %v481 = vsel %vm417, %v343, %v449
  %v482 = vsel %vm418, %v348, %v450
  %v483 = vsel %vm419, %v353, %v451
  %v484 = vsel %vm420, %v358, %v452
  %v485 = vsel %vm421, %v363, %v453
  %v486 = vsel %vm422, %v368, %v454
  %v487 = vsel %vm423, %v373, %v455
  %v488 = vsel %vm424, %v378, %v456
  %v489 = vsel %vm425, %v383, %v457
  %v490 = vsel %vm426, %v388, %v458
  %v491 = vsel %vm427, %v393, %v459
  %v492 = vld [vmem:[%s3] sm:$0xff]
  %v493 = vld [vmem:[%s3 + $0x8] sm:$0xff]
  %v494 = vld [vmem:[%s3 + $0x10] sm:$0xff]
  %v495 = vld [vmem:[%s3 + $0x18] sm:$0xff]
  %v496 = vld [vmem:[%s3 + $0x20] sm:$0xff]
  %v497 = vld [vmem:[%s3 + $0x28] sm:$0xff]
  %v498 = vld [vmem:[%s3 + $0x30] sm:$0xff]
  %v499 = vld [vmem:[%s3 + $0x38] sm:$0xff]
  %v500 = vlaneseq
  %v501 = vshrl.u32 %v500, 7
  %v502 = vsub.s32 1, %v501
  %v503 = vrot.slane %v61, %v502
  %vm504 = vcmask 523264
  %v506 = vsel %vm504, %v460, 0
  %v509 = vsel %vm504, %v461, 0
  %v512 = vsel %vm504, %v462, 0
  %v515 = vsel %vm504, %v463, 0
  %v518 = vsel %vm504, %v464, 0
  %v521 = vsel %vm504, %v465, 0
  %v524 = vsel %vm504, %v466, 0
  %v527 = vsel %vm504, %v467, 0
  %v530 = vsel %vm504, %v468, 0
  %v533 = vsel %vm504, %v469, 0
  %v536 = vsel %vm504, %v470, 0
  %v539 = vsel %vm504, %v471, 0
  %v542 = vsel %vm504, %v472, 0
  %v545 = vsel %vm504, %v473, 0
  %v548 = vsel %vm504, %v474, 0
  %v551 = vsel %vm504, %v475, 0
  %v554 = vsel %vm504, %v476, 0
  %v557 = vsel %vm504, %v477, 0
  %v560 = vsel %vm504, %v478, 0
  %v563 = vsel %vm504, %v479, 0
  %v566 = vsel %vm504, %v480, 0
  %v569 = vsel %vm504, %v481, 0
  %v572 = vsel %vm504, %v482, 0
  %v575 = vsel %vm504, %v483, 0
  %v578 = vsel %vm504, %v484, 0
  %v581 = vsel %vm504, %v485, 0
  %v584 = vsel %vm504, %v486, 0
  %v587 = vsel %vm504, %v487, 0
  %v590 = vsel %vm504, %v488, 0
  %v593 = vsel %vm504, %v489, 0
  %v596 = vsel %vm504, %v490, 0
  %v599 = vsel %vm504, %v491, 0
  %601 = vmatprep.subr.mxu0 0.0
  %602 = vmatpush1.msra.mxu0 %v492
  %603 = vmatprep.subr.mxu0 0.0
  %604 = vmatpush1.msra.mxu0 %v493
  %605 = vmatprep.subr.mxu0 0.0
  %606 = vmatpush1.msra.mxu0 %v494
  %607 = vmatprep.subr.mxu0 0.0
  %608 = vmatpush1.msra.mxu0 %v495
  %609 = vmatprep.subr.mxu0 0.0
  %610 = vmatpush1.msra.mxu0 %v496
  %611 = vmatprep.subr.mxu0 0.0
  %612 = vmatpush1.msra.mxu0 %v497
  %613 = vmatprep.subr.mxu0 0.0
  %614 = vmatpush1.msra.mxu0 %v498
  %615 = vmatprep.subr.mxu0 0.0
  %616 = vmatpush1.msra.mxu0 %v499
  %617 = vmatprep.subr.mxu0 0.0
  %618 = vmatpush1.msra.mxu0 0.0
  %619 = vmatprep.subr.mxu0 0.0
  %620 = vmatpush1.msra.mxu0 0.0
  %621 = vmatprep.subr.mxu0 0.0
  %622 = vmatpush1.msra.mxu0 0.0
  %623 = vmatprep.subr.mxu0 0.0
  %624 = vmatpush1.msra.mxu0 0.0
  %625 = vmatprep.subr.mxu0 0.0
  %626 = vmatpush1.msra.mxu0 0.0
  %627 = vmatprep.subr.mxu0 0.0
  %628 = vmatpush1.msra.mxu0 0.0
  %629 = vmatprep.subr.mxu0 0.0
  %630 = vmatpush1.msra.mxu0 0.0
  %631 = vmatprep.subr.mxu0 0.0
  %632 = vmatpush1.msra.mxu0 0.0
  %633 = vmatprep.subr.mxu0 0.0
  %634 = vmatpush1.msra.mxu0 0.0
  %635 = vmatprep.subr.mxu0 0.0
  %636 = vmatpush1.msra.mxu0 0.0
  %637 = vmatprep.subr.mxu0 0.0
  %638 = vmatpush1.msra.mxu0 0.0
  %639 = vmatprep.subr.mxu0 0.0
  %640 = vmatpush1.msra.mxu0 0.0
  %641 = vmatprep.subr.mxu0 0.0
  %642 = vmatpush1.msra.mxu0 0.0
  %643 = vmatprep.subr.mxu0 0.0
  %644 = vmatpush1.msra.mxu0 0.0
  %645 = vmatprep.subr.mxu0 0.0
  %646 = vmatpush1.msra.mxu0 0.0
  %647 = vmatprep.subr.mxu0 0.0
  %648 = vmatpush1.msra.mxu0 0.0
  %649 = vmatprep.subr.mxu0 0.0
  %650 = vmatpush1.msra.mxu0 0.0
  %651 = vmatprep.subr.mxu0 0.0
  %652 = vmatpush1.msra.mxu0 0.0
  %653 = vmatprep.subr.mxu0 0.0
  %654 = vmatpush1.msra.mxu0 0.0
  %655 = vmatprep.subr.mxu0 0.0
  %656 = vmatpush1.msra.mxu0 0.0
  %657 = vmatprep.subr.mxu0 0.0
  %658 = vmatpush1.msra.mxu0 0.0
  %659 = vmatprep.subr.mxu0 0.0
  %660 = vmatpush1.msra.mxu0 0.0
  %661 = vmatprep.subr.mxu0 0.0
  %662 = vmatpush1.msra.mxu0 0.0
  %663 = vmatprep.subr.mxu0 0.0
  %664 = vmatpush1.msra.mxu0 0.0
  %665 = vmatprep.mubr.f32.mxu0 0.0
  %666 = vmatmul.mubr.f32.gmra.mrb[0].mxu0 %v506
  %v667 = vpop.f32.mrb[0].mxu0
  %v668 = vadd.f32 %v503, %v667
  %v669 = vpop.f32.mrb[0].mxu0
  %670 = vmatprep.mubr.f32.mxu0 0.0
  %671 = vmatmul.mubr.f32.gmra.mrb[0].mxu0 %v509
  %v672 = vpop.f32.mrb[0].mxu0
  %v673 = vadd.f32 %v503, %v672
  %v674 = vpop.f32.mrb[0].mxu0
  %675 = vmatprep.mubr.f32.mxu0 0.0
  %676 = vmatmul.mubr.f32.gmra.mrb[0].mxu0 %v512
  %v677 = vpop.f32.mrb[0].mxu0
  %v678 = vadd.f32 %v503, %v677
  %v679 = vpop.f32.mrb[0].mxu0
  %680 = vmatprep.mubr.f32.mxu0 0.0
  %681 = vmatmul.mubr.f32.gmra.mrb[0].mxu0 %v515
  %v682 = vpop.f32.mrb[0].mxu0
  %v683 = vadd.f32 %v503, %v682
  %v684 = vpop.f32.mrb[0].mxu0
  %685 = vmatprep.mubr.f32.mxu0 0.0
  %686 = vmatmul.mubr.f32.gmra.mrb[0].mxu0 %v518
  %v687 = vpop.f32.mrb[0].mxu0
  %v688 = vadd.f32 %v503, %v687
  %v689 = vpop.f32.mrb[0].mxu0
  %690 = vmatprep.mubr.f32.mxu0 0.0
  %691 = vmatmul.mubr.f32.gmra.mrb[0].mxu0 %v521
  %v692 = vpop.f32.mrb[0].mxu0
  %v693 = vadd.f32 %v503, %v692
  %v694 = vpop.f32.mrb[0].mxu0
  %695 = vmatprep.mubr.f32.mxu0 0.0
  %696 = vmatmul.mubr.f32.gmra.mrb[0].mxu0 %v524
  %v697 = vpop.f32.mrb[0].mxu0
  %v698 = vadd.f32 %v503, %v697
  %v699 = vpop.f32.mrb[0].mxu0
  %700 = vmatprep.mubr.f32.mxu0 0.0
  %701 = vmatmul.mubr.f32.gmra.mrb[0].mxu0 %v527
  %v702 = vpop.f32.mrb[0].mxu0
  %v703 = vadd.f32 %v503, %v702
  %v704 = vpop.f32.mrb[0].mxu0
  %705 = vmatprep.mubr.f32.mxu0 0.0
  %706 = vmatmul.mubr.f32.gmra.mrb[0].mxu0 %v530
  %v707 = vpop.f32.mrb[0].mxu0
  %v708 = vadd.f32 %v503, %v707
  %v709 = vpop.f32.mrb[0].mxu0
  %710 = vmatprep.mubr.f32.mxu0 0.0
  %711 = vmatmul.mubr.f32.gmra.mrb[0].mxu0 %v533
  %v712 = vpop.f32.mrb[0].mxu0
  %v713 = vadd.f32 %v503, %v712
  %v714 = vpop.f32.mrb[0].mxu0
  %715 = vmatprep.mubr.f32.mxu0 0.0
  %716 = vmatmul.mubr.f32.gmra.mrb[0].mxu0 %v536
  %v717 = vpop.f32.mrb[0].mxu0
  %v718 = vadd.f32 %v503, %v717
  %v719 = vpop.f32.mrb[0].mxu0
  %720 = vmatprep.mubr.f32.mxu0 0.0
  %721 = vmatmul.mubr.f32.gmra.mrb[0].mxu0 %v539
  %v722 = vpop.f32.mrb[0].mxu0
  %v723 = vadd.f32 %v503, %v722
  %v724 = vpop.f32.mrb[0].mxu0
  %725 = vmatprep.mubr.f32.mxu0 0.0
  %726 = vmatmul.mubr.f32.gmra.mrb[0].mxu0 %v542
  %v727 = vpop.f32.mrb[0].mxu0
  %v728 = vadd.f32 %v503, %v727
  %v729 = vpop.f32.mrb[0].mxu0
  %730 = vmatprep.mubr.f32.mxu0 0.0
  %731 = vmatmul.mubr.f32.gmra.mrb[0].mxu0 %v545
  %v732 = vpop.f32.mrb[0].mxu0
  %v733 = vadd.f32 %v503, %v732
  %v734 = vpop.f32.mrb[0].mxu0
  %735 = vmatprep.mubr.f32.mxu0 0.0
  %736 = vmatmul.mubr.f32.gmra.mrb[0].mxu0 %v548
  %v737 = vpop.f32.mrb[0].mxu0
  %v738 = vadd.f32 %v503, %v737
  %v739 = vpop.f32.mrb[0].mxu0
  %740 = vmatprep.mubr.f32.mxu0 0.0
  %741 = vmatmul.mubr.f32.gmra.mrb[0].mxu0 %v551
  %v742 = vpop.f32.mrb[0].mxu0
  %v743 = vadd.f32 %v503, %v742
  %v744 = vpop.f32.mrb[0].mxu0
  %745 = vmatprep.mubr.f32.mxu0 0.0
  %746 = vmatmul.mubr.f32.gmra.mrb[0].mxu0 %v554
  %v747 = vpop.f32.mrb[0].mxu0
  %v748 = vadd.f32 %v503, %v747
  %v749 = vpop.f32.mrb[0].mxu0
  %750 = vmatprep.mubr.f32.mxu0 0.0
  %751 = vmatmul.mubr.f32.gmra.mrb[0].mxu0 %v557
  %v752 = vpop.f32.mrb[0].mxu0
  %v753 = vadd.f32 %v503, %v752
  %v754 = vpop.f32.mrb[0].mxu0
  %755 = vmatprep.mubr.f32.mxu0 0.0
  %756 = vmatmul.mubr.f32.gmra.mrb[0].mxu0 %v560
  %v757 = vpop.f32.mrb[0].mxu0
  %v758 = vadd.f32 %v503, %v757
  %v759 = vpop.f32.mrb[0].mxu0
  %760 = vmatprep.mubr.f32.mxu0 0.0
  %761 = vmatmul.mubr.f32.gmra.mrb[0].mxu0 %v563
  %v762 = vpop.f32.mrb[0].mxu0
  %v763 = vadd.f32 %v503, %v762
  %v764 = vpop.f32.mrb[0].mxu0
  %765 = vmatprep.mubr.f32.mxu0 0.0
  %766 = vmatmul.mubr.f32.gmra.mrb[0].mxu0 %v566
  %v767 = vpop.f32.mrb[0].mxu0
  %v768 = vadd.f32 %v503, %v767
  %v769 = vpop.f32.mrb[0].mxu0
  %770 = vmatprep.mubr.f32.mxu0 0.0
  %771 = vmatmul.mubr.f32.gmra.mrb[0].mxu0 %v569
  %v772 = vpop.f32.mrb[0].mxu0
  %v773 = vadd.f32 %v503, %v772
  %v774 = vpop.f32.mrb[0].mxu0
  %775 = vmatprep.mubr.f32.mxu0 0.0
  %776 = vmatmul.mubr.f32.gmra.mrb[0].mxu0 %v572
  %v777 = vpop.f32.mrb[0].mxu0
  %v778 = vadd.f32 %v503, %v777
  %v779 = vpop.f32.mrb[0].mxu0
  %780 = vmatprep.mubr.f32.mxu0 0.0
  %781 = vmatmul.mubr.f32.gmra.mrb[0].mxu0 %v575
  %v782 = vpop.f32.mrb[0].mxu0
  %v783 = vadd.f32 %v503, %v782
  %v784 = vpop.f32.mrb[0].mxu0
  %785 = vmatprep.mubr.f32.mxu0 0.0
  %786 = vmatmul.mubr.f32.gmra.mrb[0].mxu0 %v578
  %v787 = vpop.f32.mrb[0].mxu0
  %v788 = vadd.f32 %v503, %v787
  %v789 = vpop.f32.mrb[0].mxu0
  %790 = vmatprep.mubr.f32.mxu0 0.0
  %791 = vmatmul.mubr.f32.gmra.mrb[0].mxu0 %v581
  %v792 = vpop.f32.mrb[0].mxu0
  %v793 = vadd.f32 %v503, %v792
  %v794 = vpop.f32.mrb[0].mxu0
  %795 = vmatprep.mubr.f32.mxu0 0.0
  %796 = vmatmul.mubr.f32.gmra.mrb[0].mxu0 %v584
  %v797 = vpop.f32.mrb[0].mxu0
  %v798 = vadd.f32 %v503, %v797
  %v799 = vpop.f32.mrb[0].mxu0
  %800 = vmatprep.mubr.f32.mxu0 0.0
  %801 = vmatmul.mubr.f32.gmra.mrb[0].mxu0 %v587
  %v802 = vpop.f32.mrb[0].mxu0
  %v803 = vadd.f32 %v503, %v802
  %v804 = vpop.f32.mrb[0].mxu0
  %805 = vmatprep.mubr.f32.mxu0 0.0
  %806 = vmatmul.mubr.f32.gmra.mrb[0].mxu0 %v590
  %v807 = vpop.f32.mrb[0].mxu0
  %v808 = vadd.f32 %v503, %v807
  %v809 = vpop.f32.mrb[0].mxu0
  %810 = vmatprep.mubr.f32.mxu0 0.0
  %811 = vmatmul.mubr.f32.gmra.mrb[0].mxu0 %v593
  %v812 = vpop.f32.mrb[0].mxu0
  %v813 = vadd.f32 %v503, %v812
  %v814 = vpop.f32.mrb[0].mxu0
  %815 = vmatprep.mubr.f32.mxu0 0.0
  %816 = vmatmul.mubr.f32.gmra.mrb[0].mxu0 %v596
  %v817 = vpop.f32.mrb[0].mxu0
  %v818 = vadd.f32 %v503, %v817
  %v819 = vpop.f32.mrb[0].mxu0
  %820 = vmatprep.mubr.f32.mxu0 0.0
  %821 = vmatmul.mubr.f32.gmra.mrb[0].mxu0 %v599
  %v822 = vpop.f32.mrb[0].mxu0
  %v823 = vadd.f32 %v503, %v822
  %v824 = vpop.f32.mrb[0].mxu0
  %825 = vdwg.mxu0
  %vm826 = vcmp.gt.f32.partialorder %v668, 0.0
  %vm827 = vcmp.gt.f32.partialorder %v673, 0.0
  %vm828 = vcmp.gt.f32.partialorder %v678, 0.0
  %vm829 = vcmp.gt.f32.partialorder %v683, 0.0
  %vm830 = vcmp.gt.f32.partialorder %v688, 0.0
  %vm831 = vcmp.gt.f32.partialorder %v693, 0.0
  %vm832 = vcmp.gt.f32.partialorder %v698, 0.0
  %vm833 = vcmp.gt.f32.partialorder %v703, 0.0
  %vm834 = vcmp.gt.f32.partialorder %v708, 0.0
  %vm835 = vcmp.gt.f32.partialorder %v713, 0.0
  %vm836 = vcmp.gt.f32.partialorder %v718, 0.0
  %vm837 = vcmp.gt.f32.partialorder %v723, 0.0
  %vm838 = vcmp.gt.f32.partialorder %v728, 0.0
  %vm839 = vcmp.gt.f32.partialorder %v733, 0.0
  %vm840 = vcmp.gt.f32.partialorder %v738, 0.0
  %vm841 = vcmp.gt.f32.partialorder %v743, 0.0
  %vm842 = vcmp.gt.f32.partialorder %v748, 0.0
  %vm843 = vcmp.gt.f32.partialorder %v753, 0.0
  %vm844 = vcmp.gt.f32.partialorder %v758, 0.0
  %vm845 = vcmp.gt.f32.partialorder %v763, 0.0
  %vm846 = vcmp.gt.f32.partialorder %v768, 0.0
  %vm847 = vcmp.gt.f32.partialorder %v773, 0.0
  %vm848 = vcmp.gt.f32.partialorder %v778, 0.0
  %vm849 = vcmp.gt.f32.partialorder %v783, 0.0
  %vm850 = vcmp.gt.f32.partialorder %v788, 0.0
  %vm851 = vcmp.gt.f32.partialorder %v793, 0.0
  %vm852 = vcmp.gt.f32.partialorder %v798, 0.0
  %vm853 = vcmp.gt.f32.partialorder %v803, 0.0
  %vm854 = vcmp.gt.f32.partialorder %v808, 0.0
  %vm855 = vcmp.gt.f32.partialorder %v813, 0.0
  %vm856 = vcmp.gt.f32.partialorder %v818, 0.0
  %vm857 = vcmp.gt.f32.partialorder %v823, 0.0
  %v858 = vmul.f32 %v668, 0.01
  %v859 = vmul.f32 %v673, 0.01
  %v860 = vmul.f32 %v678, 0.01
  %v861 = vmul.f32 %v683, 0.01
  %v862 = vmul.f32 %v688, 0.01
  %v863 = vmul.f32 %v693, 0.01
  %v864 = vmul.f32 %v698, 0.01
  %v865 = vmul.f32 %v703, 0.01
  %v866 = vmul.f32 %v708, 0.01
  %v867 = vmul.f32 %v713, 0.01
  %v868 = vmul.f32 %v718, 0.01
  %v869 = vmul.f32 %v723, 0.01
  %v870 = vmul.f32 %v728, 0.01
  %v871 = vmul.f32 %v733, 0.01
  %v872 = vmul.f32 %v738, 0.01
  %v873 = vmul.f32 %v743, 0.01
  %v874 = vmul.f32 %v748, 0.01
  %v875 = vmul.f32 %v753, 0.01
  %v876 = vmul.f32 %v758, 0.01
  %v877 = vmul.f32 %v763, 0.01
  %v878 = vmul.f32 %v768, 0.01
  %v879 = vmul.f32 %v773, 0.01
  %v880 = vmul.f32 %v778, 0.01
  %v881 = vmul.f32 %v783, 0.01
  %v882 = vmul.f32 %v788, 0.01
  %v883 = vmul.f32 %v793, 0.01
  %v884 = vmul.f32 %v798, 0.01
  %v885 = vmul.f32 %v803, 0.01
  %v886 = vmul.f32 %v808, 0.01
  %v887 = vmul.f32 %v813, 0.01
  %v888 = vmul.f32 %v818, 0.01
  %v889 = vmul.f32 %v823, 0.01
  %v890 = vsel %vm826, %v668, %v858
  %v891 = vsel %vm827, %v673, %v859
  %v892 = vsel %vm828, %v678, %v860
  %v893 = vsel %vm829, %v683, %v861
  %v894 = vsel %vm830, %v688, %v862
  %v895 = vsel %vm831, %v693, %v863
  %v896 = vsel %vm832, %v698, %v864
  %v897 = vsel %vm833, %v703, %v865
  %v898 = vsel %vm834, %v708, %v866
  %v899 = vsel %vm835, %v713, %v867
  %v900 = vsel %vm836, %v718, %v868
  %v901 = vsel %vm837, %v723, %v869
  %v902 = vsel %vm838, %v728, %v870
  %v903 = vsel %vm839, %v733, %v871
  %v904 = vsel %vm840, %v738, %v872
  %v905 = vsel %vm841, %v743, %v873
  %v906 = vsel %vm842, %v748, %v874
  %v907 = vsel %vm843, %v753, %v875
  %v908 = vsel %vm844, %v758, %v876
  %v909 = vsel %vm845, %v763, %v877
  %v910 = vsel %vm846, %v768, %v878
  %v911 = vsel %vm847, %v773, %v879
  %v912 = vsel %vm848, %v778, %v880
  %v913 = vsel %vm849, %v783, %v881
  %v914 = vsel %vm850, %v788, %v882
  %v915 = vsel %vm851, %v793, %v883
  %v916 = vsel %vm852, %v798, %v884
  %v917 = vsel %vm853, %v803, %v885
  %v918 = vsel %vm854, %v808, %v886
  %v919 = vsel %vm855, %v813, %v887
  %v920 = vsel %vm856, %v818, %v888
  %v921 = vsel %vm857, %v823, %v889
  %v922 = vld [vmem:[%s4] sm:$0xff]
  %v923 = vld [vmem:[%s4 + $0x8] sm:$0xff]
  %v924 = vld [vmem:[%s4 + $0x10] sm:$0xff]
  %v925 = vld [vmem:[%s4 + $0x18] sm:$0xff]
  %v926 = vld [vmem:[%s1] sm:$0xff]
  %v927 = vld [vmem:[%s1 + $0x8] sm:$0xff]
  %v928 = vld [vmem:[%s1 + $0x10] sm:$0xff]
  %v929 = vld [vmem:[%s1 + $0x18] sm:$0xff]
  %v930 = vld [vmem:[%s1 + $0x20] sm:$0xff]
  %v931 = vld [vmem:[%s1 + $0x28] sm:$0xff]
  %v932 = vld [vmem:[%s1 + $0x30] sm:$0xff]
  %v933 = vld [vmem:[%s1 + $0x38] sm:$0xff]
  %v934 = vld [vmem:[%s1 + $0x40] sm:$0xff]
  %v935 = vld [vmem:[%s1 + $0x48] sm:$0xff]
  %v936 = vld [vmem:[%s1 + $0x50] sm:$0xff]
  %v937 = vld [vmem:[%s1 + $0x58] sm:$0xff]
  %v938 = vld [vmem:[%s1 + $0x60] sm:$0xff]
  %v939 = vld [vmem:[%s1 + $0x68] sm:$0xff]
  %v940 = vld [vmem:[%s1 + $0x70] sm:$0xff]
  %v941 = vld [vmem:[%s1 + $0x78] sm:$0xff]
  %v942 = vld [vmem:[%s1 + $0x80] sm:$0xff]
  %v943 = vld [vmem:[%s1 + $0x88] sm:$0xff]
  %v944 = vld [vmem:[%s1 + $0x90] sm:$0xff]
  %v945 = vld [vmem:[%s1 + $0x98] sm:$0xff]
  %v946 = vld [vmem:[%s1 + $0xa0] sm:$0xff]
  %v947 = vld [vmem:[%s1 + $0xa8] sm:$0xff]
  %v948 = vld [vmem:[%s1 + $0xb0] sm:$0xff]
  %v949 = vld [vmem:[%s1 + $0xb8] sm:$0xff]
  %v950 = vld [vmem:[%s1 + $0xc0] sm:$0xff]
  %v951 = vld [vmem:[%s1 + $0xc8] sm:$0xff]
  %v952 = vld [vmem:[%s1 + $0xd0] sm:$0xff]
  %v953 = vld [vmem:[%s1 + $0xd8] sm:$0xff]
  %v954 = vld [vmem:[%s1 + $0xe0] sm:$0xff]
  %v955 = vld [vmem:[%s1 + $0xe8] sm:$0xff]
  %v956 = vld [vmem:[%s1 + $0xf0] sm:$0xff]
  %v957 = vld [vmem:[%s1 + $0xf8] sm:$0xff]
  %v958 = vld [vmem:[%s5] sm:$0x3]
  %vm959 = vcmask 15360
  %v961 = vsel %vm959, %v926, 0
  %v964 = vsel %vm959, %v927, 0
  %v967 = vsel %vm959, %v928, 0
  %v970 = vsel %vm959, %v929, 0
  %v973 = vsel %vm959, %v930, 0
  %v976 = vsel %vm959, %v931, 0
  %v979 = vsel %vm959, %v932, 0
  %v982 = vsel %vm959, %v933, 0
  %v985 = vsel %vm959, %v934, 0
  %v988 = vsel %vm959, %v935, 0
  %v991 = vsel %vm959, %v936, 0
  %v994 = vsel %vm959, %v937, 0
  %v997 = vsel %vm959, %v938, 0
  %v1000 = vsel %vm959, %v939, 0
  %v1003 = vsel %vm959, %v940, 0
  %v1006 = vsel %vm959, %v941, 0
  %v1009 = vsel %vm959, %v942, 0
  %v1012 = vsel %vm959, %v943, 0
  %v1015 = vsel %vm959, %v944, 0
  %v1018 = vsel %vm959, %v945, 0
  %v1021 = vsel %vm959, %v946, 0
  %v1024 = vsel %vm959, %v947, 0
  %v1027 = vsel %vm959, %v948, 0
  %v1030 = vsel %vm959, %v949, 0
  %v1033 = vsel %vm959, %v950, 0
  %v1036 = vsel %vm959, %v951, 0
  %v1039 = vsel %vm959, %v952, 0
  %v1042 = vsel %vm959, %v953, 0
  %v1045 = vsel %vm959, %v954, 0
  %v1048 = vsel %vm959, %v955, 0
  %v1051 = vsel %vm959, %v956, 0
  %v1054 = vsel %vm959, %v957, 0
  %vm1056 = vcmask 1041408
  %v1058 = vsel %vm1056, %v958, 0
  %1060 = vmatprep.subr.mxu0 0.0
  %1061 = vmatpush1.msra.mxu0 %v1058
  %1062 = vmatprep.subr.mxu0 0.0
  %1063 = vmatpush1.msra.mxu0 0.0
  %1064 = vmatprep.subr.mxu0 0.0
  %1065 = vmatpush1.msra.mxu0 0.0
  %1066 = vmatprep.subr.mxu0 0.0
  %1067 = vmatpush1.msra.mxu0 0.0
  %1068 = vmatprep.subr.mxu0 0.0
  %1069 = vmatpush1.msra.mxu0 0.0
  %1070 = vmatprep.subr.mxu0 0.0
  %1071 = vmatpush1.msra.mxu0 0.0
  %1072 = vmatprep.subr.mxu0 0.0
  %1073 = vmatpush1.msra.mxu0 0.0
  %1074 = vmatprep.subr.mxu0 0.0
  %1075 = vmatpush1.msra.mxu0 0.0
  %1076 = vmatprep.subr.mxu0 0.0
  %1077 = vmatpush1.msra.mxu0 0.0
  %1078 = vmatprep.subr.mxu0 0.0
  %1079 = vmatpush1.msra.mxu0 0.0
  %1080 = vmatprep.subr.mxu0 0.0
  %1081 = vmatpush1.msra.mxu0 0.0
  %1082 = vmatprep.subr.mxu0 0.0
  %1083 = vmatpush1.msra.mxu0 0.0
  %1084 = vmatprep.subr.mxu0 0.0
  %1085 = vmatpush1.msra.mxu0 0.0
  %1086 = vmatprep.subr.mxu0 0.0
  %1087 = vmatpush1.msra.mxu0 0.0
  %1088 = vmatprep.subr.mxu0 0.0
  %1089 = vmatpush1.msra.mxu0 0.0
  %1090 = vmatprep.subr.mxu0 0.0
  %1091 = vmatpush1.msra.mxu0 0.0
  %1092 = vmatprep.subr.mxu0 0.0
  %1093 = vmatpush1.msra.mxu0 0.0
  %1094 = vmatprep.subr.mxu0 0.0
  %1095 = vmatpush1.msra.mxu0 0.0
  %1096 = vmatprep.subr.mxu0 0.0
  %1097 = vmatpush1.msra.mxu0 0.0
  %1098 = vmatprep.subr.mxu0 0.0
  %1099 = vmatpush1.msra.mxu0 0.0
  %1100 = vmatprep.subr.mxu0 0.0
  %1101 = vmatpush1.msra.mxu0 0.0
  %1102 = vmatprep.subr.mxu0 0.0
  %1103 = vmatpush1.msra.mxu0 0.0
  %1104 = vmatprep.subr.mxu0 0.0
  %1105 = vmatpush1.msra.mxu0 0.0
  %1106 = vmatprep.subr.mxu0 0.0
  %1107 = vmatpush1.msra.mxu0 0.0
  %1108 = vmatprep.subr.mxu0 0.0
  %1109 = vmatpush1.msra.mxu0 0.0
  %1110 = vmatprep.subr.mxu0 0.0
  %1111 = vmatpush1.msra.mxu0 0.0
  %1112 = vmatprep.subr.mxu0 0.0
  %1113 = vmatpush1.msra.mxu0 0.0
  %1114 = vmatprep.subr.mxu0 0.0
  %1115 = vmatpush1.msra.mxu0 0.0
  %1116 = vmatprep.subr.mxu0 0.0
  %1117 = vmatpush1.msra.mxu0 0.0
  %1118 = vmatprep.subr.mxu0 0.0
  %1119 = vmatpush1.msra.mxu0 0.0
  %1120 = vmatprep.subr.mxu0 0.0
  %1121 = vmatpush1.msra.mxu0 0.0
  %1122 = vmatprep.subr.mxu0 0.0
  %1123 = vmatpush1.msra.mxu0 0.0
  %1124 = vmatprep.mubr.f32.mxu0 0.0
  %1125 = vmatmul.mubr.f32.gmra.mrb[0].mxu0 %v961
  %v1126 = vpop.f32.mrb[0].mxu0
  %v1127 = vadd.f32 0.0, %v1126
  %v1128 = vpop.f32.mrb[0].mxu0
  %1129 = vmatprep.mubr.f32.mxu0 0.0
  %1130 = vmatmul.mubr.f32.gmra.mrb[0].mxu0 %v964
  %v1131 = vpop.f32.mrb[0].mxu0
  %v1132 = vadd.f32 0.0, %v1131
  %v1133 = vpop.f32.mrb[0].mxu0
  %1134 = vmatprep.mubr.f32.mxu0 0.0
  %1135 = vmatmul.mubr.f32.gmra.mrb[0].mxu0 %v967
  %v1136 = vpop.f32.mrb[0].mxu0
  %v1137 = vadd.f32 0.0, %v1136
  %v1138 = vpop.f32.mrb[0].mxu0
  %1139 = vmatprep.mubr.f32.mxu0 0.0
  %1140 = vmatmul.mubr.f32.gmra.mrb[0].mxu0 %v970
  %v1141 = vpop.f32.mrb[0].mxu0
  %v1142 = vadd.f32 0.0, %v1141
  %v1143 = vpop.f32.mrb[0].mxu0
  %1144 = vmatprep.mubr.f32.mxu0 0.0
  %1145 = vmatmul.mubr.f32.gmra.mrb[0].mxu0 %v973
  %v1146 = vpop.f32.mrb[0].mxu0
  %v1147 = vadd.f32 0.0, %v1146
  %v1148 = vpop.f32.mrb[0].mxu0
  %1149 = vmatprep.mubr.f32.mxu0 0.0
  %1150 = vmatmul.mubr.f32.gmra.mrb[0].mxu0 %v976
  %v1151 = vpop.f32.mrb[0].mxu0
  %v1152 = vadd.f32 0.0, %v1151
  %v1153 = vpop.f32.mrb[0].mxu0
  %1154 = vmatprep.mubr.f32.mxu0 0.0
  %1155 = vmatmul.mubr.f32.gmra.mrb[0].mxu0 %v979
  %v1156 = vpop.f32.mrb[0].mxu0
  %v1157 = vadd.f32 0.0, %v1156
  %v1158 = vpop.f32.mrb[0].mxu0
  %1159 = vmatprep.mubr.f32.mxu0 0.0
  %1160 = vmatmul.mubr.f32.gmra.mrb[0].mxu0 %v982
  %v1161 = vpop.f32.mrb[0].mxu0
  %v1162 = vadd.f32 0.0, %v1161
  %v1163 = vpop.f32.mrb[0].mxu0
  %1164 = vmatprep.mubr.f32.mxu0 0.0
  %1165 = vmatmul.mubr.f32.gmra.mrb[0].mxu0 %v985
  %v1166 = vpop.f32.mrb[0].mxu0
  %v1167 = vadd.f32 0.0, %v1166
  %v1168 = vpop.f32.mrb[0].mxu0
  %1169 = vmatprep.mubr.f32.mxu0 0.0
  %1170 = vmatmul.mubr.f32.gmra.mrb[0].mxu0 %v988
  %v1171 = vpop.f32.mrb[0].mxu0
  %v1172 = vadd.f32 0.0, %v1171
  %v1173 = vpop.f32.mrb[0].mxu0
  %1174 = vmatprep.mubr.f32.mxu0 0.0
  %1175 = vmatmul.mubr.f32.gmra.mrb[0].mxu0 %v991
  %v1176 = vpop.f32.mrb[0].mxu0
  %v1177 = vadd.f32 0.0, %v1176
  %v1178 = vpop.f32.mrb[0].mxu0
  %1179 = vmatprep.mubr.f32.mxu0 0.0
  %1180 = vmatmul.mubr.f32.gmra.mrb[0].mxu0 %v994
  %v1181 = vpop.f32.mrb[0].mxu0
  %v1182 = vadd.f32 0.0, %v1181
  %v1183 = vpop.f32.mrb[0].mxu0
  %1184 = vmatprep.mubr.f32.mxu0 0.0
  %1185 = vmatmul.mubr.f32.gmra.mrb[0].mxu0 %v997
  %v1186 = vpop.f32.mrb[0].mxu0
  %v1187 = vadd.f32 0.0, %v1186
  %v1188 = vpop.f32.mrb[0].mxu0
  %1189 = vmatprep.mubr.f32.mxu0 0.0
  %1190 = vmatmul.mubr.f32.gmra.mrb[0].mxu0 %v1000
  %v1191 = vpop.f32.mrb[0].mxu0
  %v1192 = vadd.f32 0.0, %v1191
  %v1193 = vpop.f32.mrb[0].mxu0
  %1194 = vmatprep.mubr.f32.mxu0 0.0
  %1195 = vmatmul.mubr.f32.gmra.mrb[0].mxu0 %v1003
  %v1196 = vpop.f32.mrb[0].mxu0
  %v1197 = vadd.f32 0.0, %v1196
  %v1198 = vpop.f32.mrb[0].mxu0
  %1199 = vmatprep.mubr.f32.mxu0 0.0
  %1200 = vmatmul.mubr.f32.gmra.mrb[0].mxu0 %v1006
  %v1201 = vpop.f32.mrb[0].mxu0
  %v1202 = vadd.f32 0.0, %v1201
  %v1203 = vpop.f32.mrb[0].mxu0
  %1204 = vmatprep.mubr.f32.mxu0 0.0
  %1205 = vmatmul.mubr.f32.gmra.mrb[0].mxu0 %v1009
  %v1206 = vpop.f32.mrb[0].mxu0
  %v1207 = vadd.f32 0.0, %v1206
  %v1208 = vpop.f32.mrb[0].mxu0
  %1209 = vmatprep.mubr.f32.mxu0 0.0
  %1210 = vmatmul.mubr.f32.gmra.mrb[0].mxu0 %v1012
  %v1211 = vpop.f32.mrb[0].mxu0
  %v1212 = vadd.f32 0.0, %v1211
  %v1213 = vpop.f32.mrb[0].mxu0
  %1214 = vmatprep.mubr.f32.mxu0 0.0
  %1215 = vmatmul.mubr.f32.gmra.mrb[0].mxu0 %v1015
  %v1216 = vpop.f32.mrb[0].mxu0
  %v1217 = vadd.f32 0.0, %v1216
  %v1218 = vpop.f32.mrb[0].mxu0
  %1219 = vmatprep.mubr.f32.mxu0 0.0
  %1220 = vmatmul.mubr.f32.gmra.mrb[0].mxu0 %v1018
  %v1221 = vpop.f32.mrb[0].mxu0
  %v1222 = vadd.f32 0.0, %v1221
  %v1223 = vpop.f32.mrb[0].mxu0
  %1224 = vmatprep.mubr.f32.mxu0 0.0
  %1225 = vmatmul.mubr.f32.gmra.mrb[0].mxu0 %v1021
  %v1226 = vpop.f32.mrb[0].mxu0
  %v1227 = vadd.f32 0.0, %v1226
  %v1228 = vpop.f32.mrb[0].mxu0
  %1229 = vmatprep.mubr.f32.mxu0 0.0
  %1230 = vmatmul.mubr.f32.gmra.mrb[0].mxu0 %v1024
  %v1231 = vpop.f32.mrb[0].mxu0
  %v1232 = vadd.f32 0.0, %v1231
  %v1233 = vpop.f32.mrb[0].mxu0
  %1234 = vmatprep.mubr.f32.mxu0 0.0
  %1235 = vmatmul.mubr.f32.gmra.mrb[0].mxu0 %v1027
  %v1236 = vpop.f32.mrb[0].mxu0
  %v1237 = vadd.f32 0.0, %v1236
  %v1238 = vpop.f32.mrb[0].mxu0
  %1239 = vmatprep.mubr.f32.mxu0 0.0
  %1240 = vmatmul.mubr.f32.gmra.mrb[0].mxu0 %v1030
  %v1241 = vpop.f32.mrb[0].mxu0
  %v1242 = vadd.f32 0.0, %v1241
  %v1243 = vpop.f32.mrb[0].mxu0
  %1244 = vmatprep.mubr.f32.mxu0 0.0
  %1245 = vmatmul.mubr.f32.gmra.mrb[0].mxu0 %v1033
  %v1246 = vpop.f32.mrb[0].mxu0
  %v1247 = vadd.f32 0.0, %v1246
  %v1248 = vpop.f32.mrb[0].mxu0
  %1249 = vmatprep.mubr.f32.mxu0 0.0
  %1250 = vmatmul.mubr.f32.gmra.mrb[0].mxu0 %v1036
  %v1251 = vpop.f32.mrb[0].mxu0
  %v1252 = vadd.f32 0.0, %v1251
  %v1253 = vpop.f32.mrb[0].mxu0
  %1254 = vmatprep.mubr.f32.mxu0 0.0
  %1255 = vmatmul.mubr.f32.gmra.mrb[0].mxu0 %v1039
  %v1256 = vpop.f32.mrb[0].mxu0
  %v1257 = vadd.f32 0.0, %v1256
  %v1258 = vpop.f32.mrb[0].mxu0
  %1259 = vmatprep.mubr.f32.mxu0 0.0
  %1260 = vmatmul.mubr.f32.gmra.mrb[0].mxu0 %v1042
  %v1261 = vpop.f32.mrb[0].mxu0
  %v1262 = vadd.f32 0.0, %v1261
  %v1263 = vpop.f32.mrb[0].mxu0
  %1264 = vmatprep.mubr.f32.mxu0 0.0
  %1265 = vmatmul.mubr.f32.gmra.mrb[0].mxu0 %v1045
  %v1266 = vpop.f32.mrb[0].mxu0
  %v1267 = vadd.f32 0.0, %v1266
  %v1268 = vpop.f32.mrb[0].mxu0
  %1269 = vmatprep.mubr.f32.mxu0 0.0
  %1270 = vmatmul.mubr.f32.gmra.mrb[0].mxu0 %v1048
  %v1271 = vpop.f32.mrb[0].mxu0
  %v1272 = vadd.f32 0.0, %v1271
  %v1273 = vpop.f32.mrb[0].mxu0
  %1274 = vmatprep.mubr.f32.mxu0 0.0
  %1275 = vmatmul.mubr.f32.gmra.mrb[0].mxu0 %v1051
  %v1276 = vpop.f32.mrb[0].mxu0
  %v1277 = vadd.f32 0.0, %v1276
  %v1278 = vpop.f32.mrb[0].mxu0
  %1279 = vmatprep.mubr.f32.mxu0 0.0
  %1280 = vmatmul.mubr.f32.gmra.mrb[0].mxu0 %v1054
  %v1281 = vpop.f32.mrb[0].mxu0
  %v1282 = vadd.f32 0.0, %v1281
  %v1283 = vpop.f32.mrb[0].mxu0
  %1284 = vdwg.mxu0
  %vm1285 = vcmask 261120
  %v1287 = vsel %vm1285, %v890, 0
  %v1290 = vsel %vm1285, %v891, 0
  %v1293 = vsel %vm1285, %v892, 0
  %v1296 = vsel %vm1285, %v893, 0
  %v1299 = vsel %vm1285, %v894, 0
  %v1302 = vsel %vm1285, %v895, 0
  %v1305 = vsel %vm1285, %v896, 0
  %v1308 = vsel %vm1285, %v897, 0
  %v1311 = vsel %vm1285, %v898, 0
  %v1314 = vsel %vm1285, %v899, 0
  %v1317 = vsel %vm1285, %v900, 0
  %v1320 = vsel %vm1285, %v901, 0
  %v1323 = vsel %vm1285, %v902, 0
  %v1326 = vsel %vm1285, %v903, 0
  %v1329 = vsel %vm1285, %v904, 0
  %v1332 = vsel %vm1285, %v905, 0
  %v1335 = vsel %vm1285, %v906, 0
  %v1338 = vsel %vm1285, %v907, 0
  %v1341 = vsel %vm1285, %v908, 0
  %v1344 = vsel %vm1285, %v909, 0
  %v1347 = vsel %vm1285, %v910, 0
  %v1350 = vsel %vm1285, %v911, 0
  %v1353 = vsel %vm1285, %v912, 0
  %v1356 = vsel %vm1285, %v913, 0
  %v1359 = vsel %vm1285, %v914, 0
  %v1362 = vsel %vm1285, %v915, 0
  %v1365 = vsel %vm1285, %v916, 0
  %v1368 = vsel %vm1285, %v917, 0
  %v1371 = vsel %vm1285, %v918, 0
  %v1374 = vsel %vm1285, %v919, 0
  %v1377 = vsel %vm1285, %v920, 0
  %v1380 = vsel %vm1285, %v921, 0
  %1382 = vmatprep.subr.mxu0 0.0
  %1383 = vmatpush1.msra.mxu0 %v922
  %1384 = vmatprep.subr.mxu0 0.0
  %1385 = vmatpush1.msra.mxu0 %v923
  %1386 = vmatprep.subr.mxu0 0.0
  %1387 = vmatpush1.msra.mxu0 %v924
  %1388 = vmatprep.subr.mxu0 0.0
  %1389 = vmatpush1.msra.mxu0 %v925
  %1390 = vmatprep.subr.mxu0 0.0
  %1391 = vmatpush1.msra.mxu0 0.0
  %1392 = vmatprep.subr.mxu0 0.0
  %1393 = vmatpush1.msra.mxu0 0.0
  %1394 = vmatprep.subr.mxu0 0.0
  %1395 = vmatpush1.msra.mxu0 0.0
  %1396 = vmatprep.subr.mxu0 0.0
  %1397 = vmatpush1.msra.mxu0 0.0
  %1398 = vmatprep.subr.mxu0 0.0
  %1399 = vmatpush1.msra.mxu0 0.0
  %1400 = vmatprep.subr.mxu0 0.0
  %1401 = vmatpush1.msra.mxu0 0.0
  %1402 = vmatprep.subr.mxu0 0.0
  %1403 = vmatpush1.msra.mxu0 0.0
  %1404 = vmatprep.subr.mxu0 0.0
  %1405 = vmatpush1.msra.mxu0 0.0
  %1406 = vmatprep.subr.mxu0 0.0
  %1407 = vmatpush1.msra.mxu0 0.0
  %1408 = vmatprep.subr.mxu0 0.0
  %1409 = vmatpush1.msra.mxu0 0.0
  %1410 = vmatprep.subr.mxu0 0.0
  %1411 = vmatpush1.msra.mxu0 0.0
  %1412 = vmatprep.subr.mxu0 0.0
  %1413 = vmatpush1.msra.mxu0 0.0
  %1414 = vmatprep.subr.mxu0 0.0
  %1415 = vmatpush1.msra.mxu0 0.0
  %1416 = vmatprep.subr.mxu0 0.0
  %1417 = vmatpush1.msra.mxu0 0.0
  %1418 = vmatprep.subr.mxu0 0.0
  %1419 = vmatpush1.msra.mxu0 0.0
  %1420 = vmatprep.subr.mxu0 0.0
  %1421 = vmatpush1.msra.mxu0 0.0
  %1422 = vmatprep.subr.mxu0 0.0
  %1423 = vmatpush1.msra.mxu0 0.0
  %1424 = vmatprep.subr.mxu0 0.0
  %1425 = vmatpush1.msra.mxu0 0.0
  %1426 = vmatprep.subr.mxu0 0.0
  %1427 = vmatpush1.msra.mxu0 0.0
  %1428 = vmatprep.subr.mxu0 0.0
  %1429 = vmatpush1.msra.mxu0 0.0
  %1430 = vmatprep.subr.mxu0 0.0
  %1431 = vmatpush1.msra.mxu0 0.0
  %1432 = vmatprep.subr.mxu0 0.0
  %1433 = vmatpush1.msra.mxu0 0.0
  %1434 = vmatprep.subr.mxu0 0.0
  %1435 = vmatpush1.msra.mxu0 0.0
  %1436 = vmatprep.subr.mxu0 0.0
  %1437 = vmatpush1.msra.mxu0 0.0
  %1438 = vmatprep.subr.mxu0 0.0
  %1439 = vmatpush1.msra.mxu0 0.0
  %1440 = vmatprep.subr.mxu0 0.0
  %1441 = vmatpush1.msra.mxu0 0.0
  %1442 = vmatprep.subr.mxu0 0.0
  %1443 = vmatpush1.msra.mxu0 0.0
  %1444 = vmatprep.subr.mxu0 0.0
  %1445 = vmatpush1.msra.mxu0 0.0
  %1446 = vmatprep.mubr.f32.mxu0 0.0
  %1447 = vmatmul.mubr.f32.gmra.mrb[0].mxu0 %v1287
  %v1448 = vpop.f32.mrb[0].mxu0
  %v1449 = vadd.f32 %v1127, %v1448
  %v1450 = vpop.f32.mrb[0].mxu0
  %1451 = vmatprep.mubr.f32.mxu0 0.0
  %1452 = vmatmul.mubr.f32.gmra.mrb[0].mxu0 %v1290
  %v1453 = vpop.f32.mrb[0].mxu0
  %v1454 = vadd.f32 %v1132, %v1453
  %v1455 = vpop.f32.mrb[0].mxu0
  %1456 = vmatprep.mubr.f32.mxu0 0.0
  %1457 = vmatmul.mubr.f32.gmra.mrb[0].mxu0 %v1293
  %v1458 = vpop.f32.mrb[0].mxu0
  %v1459 = vadd.f32 %v1137, %v1458
  %v1460 = vpop.f32.mrb[0].mxu0
  %1461 = vmatprep.mubr.f32.mxu0 0.0
  %1462 = vmatmul.mubr.f32.gmra.mrb[0].mxu0 %v1296
  %v1463 = vpop.f32.mrb[0].mxu0
  %v1464 = vadd.f32 %v1142, %v1463
  %v1465 = vpop.f32.mrb[0].mxu0
  %1466 = vmatprep.mubr.f32.mxu0 0.0
  %1467 = vmatmul.mubr.f32.gmra.mrb[0].mxu0 %v1299
  %v1468 = vpop.f32.mrb[0].mxu0
  %v1469 = vadd.f32 %v1147, %v1468
  %v1470 = vpop.f32.mrb[0].mxu0
  %1471 = vmatprep.mubr.f32.mxu0 0.0
  %1472 = vmatmul.mubr.f32.gmra.mrb[0].mxu0 %v1302
  %v1473 = vpop.f32.mrb[0].mxu0
  %v1474 = vadd.f32 %v1152, %v1473
  %v1475 = vpop.f32.mrb[0].mxu0
  %1476 = vmatprep.mubr.f32.mxu0 0.0
  %1477 = vmatmul.mubr.f32.gmra.mrb[0].mxu0 %v1305
  %v1478 = vpop.f32.mrb[0].mxu0
  %v1479 = vadd.f32 %v1157, %v1478
  %v1480 = vpop.f32.mrb[0].mxu0
  %1481 = vmatprep.mubr.f32.mxu0 0.0
  %1482 = vmatmul.mubr.f32.gmra.mrb[0].mxu0 %v1308
  %v1483 = vpop.f32.mrb[0].mxu0
  %v1484 = vadd.f32 %v1162, %v1483
  %v1485 = vpop.f32.mrb[0].mxu0
  %1486 = vmatprep.mubr.f32.mxu0 0.0
  %1487 = vmatmul.mubr.f32.gmra.mrb[0].mxu0 %v1311
  %v1488 = vpop.f32.mrb[0].mxu0
  %v1489 = vadd.f32 %v1167, %v1488
  %v1490 = vpop.f32.mrb[0].mxu0
  %1491 = vmatprep.mubr.f32.mxu0 0.0
  %1492 = vmatmul.mubr.f32.gmra.mrb[0].mxu0 %v1314
  %v1493 = vpop.f32.mrb[0].mxu0
  %v1494 = vadd.f32 %v1172, %v1493
  %v1495 = vpop.f32.mrb[0].mxu0
  %1496 = vmatprep.mubr.f32.mxu0 0.0
  %1497 = vmatmul.mubr.f32.gmra.mrb[0].mxu0 %v1317
  %v1498 = vpop.f32.mrb[0].mxu0
  %v1499 = vadd.f32 %v1177, %v1498
  %v1500 = vpop.f32.mrb[0].mxu0
  %1501 = vmatprep.mubr.f32.mxu0 0.0
  %1502 = vmatmul.mubr.f32.gmra.mrb[0].mxu0 %v1320
  %v1503 = vpop.f32.mrb[0].mxu0
  %v1504 = vadd.f32 %v1182, %v1503
  %v1505 = vpop.f32.mrb[0].mxu0
  %1506 = vmatprep.mubr.f32.mxu0 0.0
  %1507 = vmatmul.mubr.f32.gmra.mrb[0].mxu0 %v1323
  %v1508 = vpop.f32.mrb[0].mxu0
  %v1509 = vadd.f32 %v1187, %v1508
  %v1510 = vpop.f32.mrb[0].mxu0
  %1511 = vmatprep.mubr.f32.mxu0 0.0
  %1512 = vmatmul.mubr.f32.gmra.mrb[0].mxu0 %v1326
  %v1513 = vpop.f32.mrb[0].mxu0
  %v1514 = vadd.f32 %v1192, %v1513
  %v1515 = vpop.f32.mrb[0].mxu0
  %1516 = vmatprep.mubr.f32.mxu0 0.0
  %1517 = vmatmul.mubr.f32.gmra.mrb[0].mxu0 %v1329
  %v1518 = vpop.f32.mrb[0].mxu0
  %v1519 = vadd.f32 %v1197, %v1518
  %v1520 = vpop.f32.mrb[0].mxu0
  %1521 = vmatprep.mubr.f32.mxu0 0.0
  %1522 = vmatmul.mubr.f32.gmra.mrb[0].mxu0 %v1332
  %v1523 = vpop.f32.mrb[0].mxu0
  %v1524 = vadd.f32 %v1202, %v1523
  %v1525 = vpop.f32.mrb[0].mxu0
  %1526 = vmatprep.mubr.f32.mxu0 0.0
  %1527 = vmatmul.mubr.f32.gmra.mrb[0].mxu0 %v1335
  %v1528 = vpop.f32.mrb[0].mxu0
  %v1529 = vadd.f32 %v1207, %v1528
  %v1530 = vpop.f32.mrb[0].mxu0
  %1531 = vmatprep.mubr.f32.mxu0 0.0
  %1532 = vmatmul.mubr.f32.gmra.mrb[0].mxu0 %v1338
  %v1533 = vpop.f32.mrb[0].mxu0
  %v1534 = vadd.f32 %v1212, %v1533
  %v1535 = vpop.f32.mrb[0].mxu0
  %1536 = vmatprep.mubr.f32.mxu0 0.0
  %1537 = vmatmul.mubr.f32.gmra.mrb[0].mxu0 %v1341
  %v1538 = vpop.f32.mrb[0].mxu0
  %v1539 = vadd.f32 %v1217, %v1538
  %v1540 = vpop.f32.mrb[0].mxu0
  %1541 = vmatprep.mubr.f32.mxu0 0.0
  %1542 = vmatmul.mubr.f32.gmra.mrb[0].mxu0 %v1344
  %v1543 = vpop.f32.mrb[0].mxu0
  %v1544 = vadd.f32 %v1222, %v1543
  %v1545 = vpop.f32.mrb[0].mxu0
  %1546 = vmatprep.mubr.f32.mxu0 0.0
  %1547 = vmatmul.mubr.f32.gmra.mrb[0].mxu0 %v1347
  %v1548 = vpop.f32.mrb[0].mxu0
  %v1549 = vadd.f32 %v1227, %v1548
  %v1550 = vpop.f32.mrb[0].mxu0
  %1551 = vmatprep.mubr.f32.mxu0 0.0
  %1552 = vmatmul.mubr.f32.gmra.mrb[0].mxu0 %v1350
  %v1553 = vpop.f32.mrb[0].mxu0
  %v1554 = vadd.f32 %v1232, %v1553
  %v1555 = vpop.f32.mrb[0].mxu0
  %1556 = vmatprep.mubr.f32.mxu0 0.0
  %1557 = vmatmul.mubr.f32.gmra.mrb[0].mxu0 %v1353
  %v1558 = vpop.f32.mrb[0].mxu0
  %v1559 = vadd.f32 %v1237, %v1558
  %v1560 = vpop.f32.mrb[0].mxu0
  %1561 = vmatprep.mubr.f32.mxu0 0.0
  %1562 = vmatmul.mubr.f32.gmra.mrb[0].mxu0 %v1356
  %v1563 = vpop.f32.mrb[0].mxu0
  %v1564 = vadd.f32 %v1242, %v1563
  %v1565 = vpop.f32.mrb[0].mxu0
  %1566 = vmatprep.mubr.f32.mxu0 0.0
  %1567 = vmatmul.mubr.f32.gmra.mrb[0].mxu0 %v1359
  %v1568 = vpop.f32.mrb[0].mxu0
  %v1569 = vadd.f32 %v1247, %v1568
  %v1570 = vpop.f32.mrb[0].mxu0
  %1571 = vmatprep.mubr.f32.mxu0 0.0
  %1572 = vmatmul.mubr.f32.gmra.mrb[0].mxu0 %v1362
  %v1573 = vpop.f32.mrb[0].mxu0
  %v1574 = vadd.f32 %v1252, %v1573
  %v1575 = vpop.f32.mrb[0].mxu0
  %1576 = vmatprep.mubr.f32.mxu0 0.0
  %1577 = vmatmul.mubr.f32.gmra.mrb[0].mxu0 %v1365
  %v1578 = vpop.f32.mrb[0].mxu0
  %v1579 = vadd.f32 %v1257, %v1578
  %v1580 = vpop.f32.mrb[0].mxu0
  %1581 = vmatprep.mubr.f32.mxu0 0.0
  %1582 = vmatmul.mubr.f32.gmra.mrb[0].mxu0 %v1368
  %v1583 = vpop.f32.mrb[0].mxu0
  %v1584 = vadd.f32 %v1262, %v1583
  %v1585 = vpop.f32.mrb[0].mxu0
  %1586 = vmatprep.mubr.f32.mxu0 0.0
  %1587 = vmatmul.mubr.f32.gmra.mrb[0].mxu0 %v1371
  %v1588 = vpop.f32.mrb[0].mxu0
  %v1589 = vadd.f32 %v1267, %v1588
  %v1590 = vpop.f32.mrb[0].mxu0
  %1591 = vmatprep.mubr.f32.mxu0 0.0
  %1592 = vmatmul.mubr.f32.gmra.mrb[0].mxu0 %v1374
  %v1593 = vpop.f32.mrb[0].mxu0
  %v1594 = vadd.f32 %v1272, %v1593
  %v1595 = vpop.f32.mrb[0].mxu0
  %1596 = vmatprep.mubr.f32.mxu0 0.0
  %1597 = vmatmul.mubr.f32.gmra.mrb[0].mxu0 %v1377
  %v1598 = vpop.f32.mrb[0].mxu0
  %v1599 = vadd.f32 %v1277, %v1598
  %v1600 = vpop.f32.mrb[0].mxu0
  %1601 = vmatprep.mubr.f32.mxu0 0.0
  %1602 = vmatmul.mubr.f32.gmra.mrb[0].mxu0 %v1380
  %v1603 = vpop.f32.mrb[0].mxu0
  %v1604 = vadd.f32 %v1282, %v1603
  %v1605 = vpop.f32.mrb[0].mxu0
  %1606 = vdwg.mxu0
  %v1607 = vlaneseq
  %v1608 = vshrl.u32 %v1607, 7
  %v1609 = vsub.s32 2, %v1608
  %v1610 = vrot.slane %v61, %v1609
  %v1611 = vadd.f32 %v1449, %v1610
  %v1612 = vadd.f32 %v1454, %v1610
  %v1613 = vadd.f32 %v1459, %v1610
  %v1614 = vadd.f32 %v1464, %v1610
  %v1615 = vadd.f32 %v1469, %v1610
  %v1616 = vadd.f32 %v1474, %v1610
  %v1617 = vadd.f32 %v1479, %v1610
  %v1618 = vadd.f32 %v1484, %v1610
  %v1619 = vadd.f32 %v1489, %v1610
  %v1620 = vadd.f32 %v1494, %v1610
  %v1621 = vadd.f32 %v1499, %v1610
  %v1622 = vadd.f32 %v1504, %v1610
  %v1623 = vadd.f32 %v1509, %v1610
  %v1624 = vadd.f32 %v1514, %v1610
  %v1625 = vadd.f32 %v1519, %v1610
  %v1626 = vadd.f32 %v1524, %v1610
  %v1627 = vadd.f32 %v1529, %v1610
  %v1628 = vadd.f32 %v1534, %v1610
  %v1629 = vadd.f32 %v1539, %v1610
  %v1630 = vadd.f32 %v1544, %v1610
  %v1631 = vadd.f32 %v1549, %v1610
  %v1632 = vadd.f32 %v1554, %v1610
  %v1633 = vadd.f32 %v1559, %v1610
  %v1634 = vadd.f32 %v1564, %v1610
  %v1635 = vadd.f32 %v1569, %v1610
  %v1636 = vadd.f32 %v1574, %v1610
  %v1637 = vadd.f32 %v1579, %v1610
  %v1638 = vadd.f32 %v1584, %v1610
  %v1639 = vadd.f32 %v1589, %v1610
  %v1640 = vadd.f32 %v1594, %v1610
  %v1641 = vadd.f32 %v1599, %v1610
  %v1642 = vadd.f32 %v1604, %v1610
  %v1643 = vmax.f32 %v1611, 0.0
  %v1644 = vmax.f32 %v1612, 0.0
  %v1645 = vmax.f32 %v1613, 0.0
  %v1646 = vmax.f32 %v1614, 0.0
  %v1647 = vmax.f32 %v1615, 0.0
  %v1648 = vmax.f32 %v1616, 0.0
  %v1649 = vmax.f32 %v1617, 0.0
  %v1650 = vmax.f32 %v1618, 0.0
  %v1651 = vmax.f32 %v1619, 0.0
  %v1652 = vmax.f32 %v1620, 0.0
  %v1653 = vmax.f32 %v1621, 0.0
  %v1654 = vmax.f32 %v1622, 0.0
  %v1655 = vmax.f32 %v1623, 0.0
  %v1656 = vmax.f32 %v1624, 0.0
  %v1657 = vmax.f32 %v1625, 0.0
  %v1658 = vmax.f32 %v1626, 0.0
  %v1659 = vmax.f32 %v1627, 0.0
  %v1660 = vmax.f32 %v1628, 0.0
  %v1661 = vmax.f32 %v1629, 0.0
  %v1662 = vmax.f32 %v1630, 0.0
  %v1663 = vmax.f32 %v1631, 0.0
  %v1664 = vmax.f32 %v1632, 0.0
  %v1665 = vmax.f32 %v1633, 0.0
  %v1666 = vmax.f32 %v1634, 0.0
  %v1667 = vmax.f32 %v1635, 0.0
  %v1668 = vmax.f32 %v1636, 0.0
  %v1669 = vmax.f32 %v1637, 0.0
  %v1670 = vmax.f32 %v1638, 0.0
  %v1671 = vmax.f32 %v1639, 0.0
  %v1672 = vmax.f32 %v1640, 0.0
  %v1673 = vmax.f32 %v1641, 0.0
  %v1674 = vmax.f32 %v1642, 0.0
  %v1675 = vld [vmem:[%s6] sm:$0xff]
  %v1676 = vld [vmem:[%s6 + $0x8] sm:$0xff]
  %v1677 = vld [vmem:[%s6 + $0x10] sm:$0xff]
  %v1678 = vld [vmem:[%s6 + $0x18] sm:$0xff]
  %v1679 = vld [vmem:[%s6 + $0x20] sm:$0xff]
  %v1680 = vld [vmem:[%s6 + $0x28] sm:$0xff]
  %v1681 = vld [vmem:[%s6 + $0x30] sm:$0xff]
  %v1682 = vld [vmem:[%s6 + $0x38] sm:$0xff]
  %v1683 = vlaneseq
  %v1684 = vshrl.u32 %v1683, 7
  %v1685 = vsub.s32 3, %v1684
  %v1686 = vrot.slane %v61, %v1685
  %v1688 = vsel %vm504, %v1643, 0
  %v1691 = vsel %vm504, %v1644, 0
  %v1694 = vsel %vm504, %v1645, 0
  %v1697 = vsel %vm504, %v1646, 0
  %v1700 = vsel %vm504, %v1647, 0
  %v1703 = vsel %vm504, %v1648, 0
  %v1706 = vsel %vm504, %v1649, 0
  %v1709 = vsel %vm504, %v1650, 0
  %v1712 = vsel %vm504, %v1651, 0
  %v1715 = vsel %vm504, %v1652, 0
  %v1718 = vsel %vm504, %v1653, 0
  %v1721 = vsel %vm504, %v1654, 0
  %v1724 = vsel %vm504, %v1655, 0
  %v1727 = vsel %vm504, %v1656, 0
  %v1730 = vsel %vm504, %v1657, 0
  %v1733 = vsel %vm504, %v1658, 0
  %v1736 = vsel %vm504, %v1659, 0
  %v1739 = vsel %vm504, %v1660, 0
  %v1742 = vsel %vm504, %v1661, 0
  %v1745 = vsel %vm504, %v1662, 0
  %v1748 = vsel %vm504, %v1663, 0
  %v1751 = vsel %vm504, %v1664, 0
  %v1754 = vsel %vm504, %v1665, 0
  %v1757 = vsel %vm504, %v1666, 0
  %v1760 = vsel %vm504, %v1667, 0
  %v1763 = vsel %vm504, %v1668, 0
  %v1766 = vsel %vm504, %v1669, 0
  %v1769 = vsel %vm504, %v1670, 0
  %v1772 = vsel %vm504, %v1671, 0
  %v1775 = vsel %vm504, %v1672, 0
  %v1778 = vsel %vm504, %v1673, 0
  %v1781 = vsel %vm504, %v1674, 0
  %1783 = vmatprep.subr.mxu0 0.0
  %1784 = vmatpush1.msra.mxu0 %v1675
  %1785 = vmatprep.subr.mxu0 0.0
  %1786 = vmatpush1.msra.mxu0 %v1676
  %1787 = vmatprep.subr.mxu0 0.0
  %1788 = vmatpush1.msra.mxu0 %v1677
  %1789 = vmatprep.subr.mxu0 0.0
  %1790 = vmatpush1.msra.mxu0 %v1678
  %1791 = vmatprep.subr.mxu0 0.0
  %1792 = vmatpush1.msra.mxu0 %v1679
  %1793 = vmatprep.subr.mxu0 0.0
  %1794 = vmatpush1.msra.mxu0 %v1680
  %1795 = vmatprep.subr.mxu0 0.0
  %1796 = vmatpush1.msra.mxu0 %v1681
  %1797 = vmatprep.subr.mxu0 0.0
  %1798 = vmatpush1.msra.mxu0 %v1682
  %1799 = vmatprep.subr.mxu0 0.0
  %1800 = vmatpush1.msra.mxu0 0.0
  %1801 = vmatprep.subr.mxu0 0.0
  %1802 = vmatpush1.msra.mxu0 0.0
  %1803 = vmatprep.subr.mxu0 0.0
  %1804 = vmatpush1.msra.mxu0 0.0
  %1805 = vmatprep.subr.mxu0 0.0
  %1806 = vmatpush1.msra.mxu0 0.0
  %1807 = vmatprep.subr.mxu0 0.0
  %1808 = vmatpush1.msra.mxu0 0.0
  %1809 = vmatprep.subr.mxu0 0.0
  %1810 = vmatpush1.msra.mxu0 0.0
  %1811 = vmatprep.subr.mxu0 0.0
  %1812 = vmatpush1.msra.mxu0 0.0
  %1813 = vmatprep.subr.mxu0 0.0
  %1814 = vmatpush1.msra.mxu0 0.0
  %1815 = vmatprep.subr.mxu0 0.0
  %1816 = vmatpush1.msra.mxu0 0.0
  %1817 = vmatprep.subr.mxu0 0.0
  %1818 = vmatpush1.msra.mxu0 0.0
  %1819 = vmatprep.subr.mxu0 0.0
  %1820 = vmatpush1.msra.mxu0 0.0
  %1821 = vmatprep.subr.mxu0 0.0
  %1822 = vmatpush1.msra.mxu0 0.0
  %1823 = vmatprep.subr.mxu0 0.0
  %1824 = vmatpush1.msra.mxu0 0.0
  %1825 = vmatprep.subr.mxu0 0.0
  %1826 = vmatpush1.msra.mxu0 0.0
  %1827 = vmatprep.subr.mxu0 0.0
  %1828 = vmatpush1.msra.mxu0 0.0
  %1829 = vmatprep.subr.mxu0 0.0
  %1830 = vmatpush1.msra.mxu0 0.0
  %1831 = vmatprep.subr.mxu0 0.0
  %1832 = vmatpush1.msra.mxu0 0.0
  %1833 = vmatprep.subr.mxu0 0.0
  %1834 = vmatpush1.msra.mxu0 0.0
  %1835 = vmatprep.subr.mxu0 0.0
  %1836 = vmatpush1.msra.mxu0 0.0
  %1837 = vmatprep.subr.mxu0 0.0
  %1838 = vmatpush1.msra.mxu0 0.0
  %1839 = vmatprep.subr.mxu0 0.0
  %1840 = vmatpush1.msra.mxu0 0.0
  %1841 = vmatprep.subr.mxu0 0.0
  %1842 = vmatpush1.msra.mxu0 0.0
  %1843 = vmatprep.subr.mxu0 0.0
  %1844 = vmatpush1.msra.mxu0 0.0
  %1845 = vmatprep.subr.mxu0 0.0
  %1846 = vmatpush1.msra.mxu0 0.0
  %1847 = vmatprep.mubr.f32.mxu0 0.0
  %1848 = vmatmul.mubr.f32.gmra.mrb[0].mxu0 %v1688
  %v1849 = vpop.f32.mrb[0].mxu0
  %v1850 = vadd.f32 %v1686, %v1849
  %v1851 = vpop.f32.mrb[0].mxu0
  %1852 = vmatprep.mubr.f32.mxu0 0.0
  %1853 = vmatmul.mubr.f32.gmra.mrb[0].mxu0 %v1691
  %v1854 = vpop.f32.mrb[0].mxu0
  %v1855 = vadd.f32 %v1686, %v1854
  %v1856 = vpop.f32.mrb[0].mxu0
  %1857 = vmatprep.mubr.f32.mxu0 0.0
  %1858 = vmatmul.mubr.f32.gmra.mrb[0].mxu0 %v1694
  %v1859 = vpop.f32.mrb[0].mxu0
  %v1860 = vadd.f32 %v1686, %v1859
  %v1861 = vpop.f32.mrb[0].mxu0
  %1862 = vmatprep.mubr.f32.mxu0 0.0
  %1863 = vmatmul.mubr.f32.gmra.mrb[0].mxu0 %v1697
  %v1864 = vpop.f32.mrb[0].mxu0
  %v1865 = vadd.f32 %v1686, %v1864
  %v1866 = vpop.f32.mrb[0].mxu0
  %1867 = vmatprep.mubr.f32.mxu0 0.0
  %1868 = vmatmul.mubr.f32.gmra.mrb[0].mxu0 %v1700
  %v1869 = vpop.f32.mrb[0].mxu0
  %v1870 = vadd.f32 %v1686, %v1869
  %v1871 = vpop.f32.mrb[0].mxu0
  %1872 = vmatprep.mubr.f32.mxu0 0.0
  %1873 = vmatmul.mubr.f32.gmra.mrb[0].mxu0 %v1703
  %v1874 = vpop.f32.mrb[0].mxu0
  %v1875 = vadd.f32 %v1686, %v1874
  %v1876 = vpop.f32.mrb[0].mxu0
  %1877 = vmatprep.mubr.f32.mxu0 0.0
  %1878 = vmatmul.mubr.f32.gmra.mrb[0].mxu0 %v1706
  %v1879 = vpop.f32.mrb[0].mxu0
  %v1880 = vadd.f32 %v1686, %v1879
  %v1881 = vpop.f32.mrb[0].mxu0
  %1882 = vmatprep.mubr.f32.mxu0 0.0
  %1883 = vmatmul.mubr.f32.gmra.mrb[0].mxu0 %v1709
  %v1884 = vpop.f32.mrb[0].mxu0
  %v1885 = vadd.f32 %v1686, %v1884
  %v1886 = vpop.f32.mrb[0].mxu0
  %1887 = vmatprep.mubr.f32.mxu0 0.0
  %1888 = vmatmul.mubr.f32.gmra.mrb[0].mxu0 %v1712
  %v1889 = vpop.f32.mrb[0].mxu0
  %v1890 = vadd.f32 %v1686, %v1889
  %v1891 = vpop.f32.mrb[0].mxu0
  %1892 = vmatprep.mubr.f32.mxu0 0.0
  %1893 = vmatmul.mubr.f32.gmra.mrb[0].mxu0 %v1715
  %v1894 = vpop.f32.mrb[0].mxu0
  %v1895 = vadd.f32 %v1686, %v1894
  %v1896 = vpop.f32.mrb[0].mxu0
  %1897 = vmatprep.mubr.f32.mxu0 0.0
  %1898 = vmatmul.mubr.f32.gmra.mrb[0].mxu0 %v1718
  %v1899 = vpop.f32.mrb[0].mxu0
  %v1900 = vadd.f32 %v1686, %v1899
  %v1901 = vpop.f32.mrb[0].mxu0
  %1902 = vmatprep.mubr.f32.mxu0 0.0
  %1903 = vmatmul.mubr.f32.gmra.mrb[0].mxu0 %v1721
  %v1904 = vpop.f32.mrb[0].mxu0
  %v1905 = vadd.f32 %v1686, %v1904
  %v1906 = vpop.f32.mrb[0].mxu0
  %1907 = vmatprep.mubr.f32.mxu0 0.0
  %1908 = vmatmul.mubr.f32.gmra.mrb[0].mxu0 %v1724
  %v1909 = vpop.f32.mrb[0].mxu0
  %v1910 = vadd.f32 %v1686, %v1909
  %v1911 = vpop.f32.mrb[0].mxu0
  %1912 = vmatprep.mubr.f32.mxu0 0.0
  %1913 = vmatmul.mubr.f32.gmra.mrb[0].mxu0 %v1727
  %v1914 = vpop.f32.mrb[0].mxu0
  %v1915 = vadd.f32 %v1686, %v1914
  %v1916 = vpop.f32.mrb[0].mxu0
  %1917 = vmatprep.mubr.f32.mxu0 0.0
  %1918 = vmatmul.mubr.f32.gmra.mrb[0].mxu0 %v1730
  %v1919 = vpop.f32.mrb[0].mxu0
  %v1920 = vadd.f32 %v1686, %v1919
  %v1921 = vpop.f32.mrb[0].mxu0
  %1922 = vmatprep.mubr.f32.mxu0 0.0
  %1923 = vmatmul.mubr.f32.gmra.mrb[0].mxu0 %v1733
  %v1924 = vpop.f32.mrb[0].mxu0
  %v1925 = vadd.f32 %v1686, %v1924
  %v1926 = vpop.f32.mrb[0].mxu0
  %1927 = vmatprep.mubr.f32.mxu0 0.0
  %1928 = vmatmul.mubr.f32.gmra.mrb[0].mxu0 %v1736
  %v1929 = vpop.f32.mrb[0].mxu0
  %v1930 = vadd.f32 %v1686, %v1929
  %v1931 = vpop.f32.mrb[0].mxu0
  %1932 = vmatprep.mubr.f32.mxu0 0.0
  %1933 = vmatmul.mubr.f32.gmra.mrb[0].mxu0 %v1739
  %v1934 = vpop.f32.mrb[0].mxu0
  %v1935 = vadd.f32 %v1686, %v1934
  %v1936 = vpop.f32.mrb[0].mxu0
  %1937 = vmatprep.mubr.f32.mxu0 0.0
  %1938 = vmatmul.mubr.f32.gmra.mrb[0].mxu0 %v1742
  %v1939 = vpop.f32.mrb[0].mxu0
  %v1940 = vadd.f32 %v1686, %v1939
  %v1941 = vpop.f32.mrb[0].mxu0
  %1942 = vmatprep.mubr.f32.mxu0 0.0
  %1943 = vmatmul.mubr.f32.gmra.mrb[0].mxu0 %v1745
  %v1944 = vpop.f32.mrb[0].mxu0
  %v1945 = vadd.f32 %v1686, %v1944
  %v1946 = vpop.f32.mrb[0].mxu0
  %1947 = vmatprep.mubr.f32.mxu0 0.0
  %1948 = vmatmul.mubr.f32.gmra.mrb[0].mxu0 %v1748
  %v1949 = vpop.f32.mrb[0].mxu0
  %v1950 = vadd.f32 %v1686, %v1949
  %v1951 = vpop.f32.mrb[0].mxu0
  %1952 = vmatprep.mubr.f32.mxu0 0.0
  %1953 = vmatmul.mubr.f32.gmra.mrb[0].mxu0 %v1751
  %v1954 = vpop.f32.mrb[0].mxu0
  %v1955 = vadd.f32 %v1686, %v1954
  %v1956 = vpop.f32.mrb[0].mxu0
  %1957 = vmatprep.mubr.f32.mxu0 0.0
  %1958 = vmatmul.mubr.f32.gmra.mrb[0].mxu0 %v1754
  %v1959 = vpop.f32.mrb[0].mxu0
  %v1960 = vadd.f32 %v1686, %v1959
  %v1961 = vpop.f32.mrb[0].mxu0
  %1962 = vmatprep.mubr.f32.mxu0 0.0
  %1963 = vmatmul.mubr.f32.gmra.mrb[0].mxu0 %v1757
  %v1964 = vpop.f32.mrb[0].mxu0
  %v1965 = vadd.f32 %v1686, %v1964
  %v1966 = vpop.f32.mrb[0].mxu0
  %1967 = vmatprep.mubr.f32.mxu0 0.0
  %1968 = vmatmul.mubr.f32.gmra.mrb[0].mxu0 %v1760
  %v1969 = vpop.f32.mrb[0].mxu0
  %v1970 = vadd.f32 %v1686, %v1969
  %v1971 = vpop.f32.mrb[0].mxu0
  %1972 = vmatprep.mubr.f32.mxu0 0.0
  %1973 = vmatmul.mubr.f32.gmra.mrb[0].mxu0 %v1763
  %v1974 = vpop.f32.mrb[0].mxu0
  %v1975 = vadd.f32 %v1686, %v1974
  %v1976 = vpop.f32.mrb[0].mxu0
  %1977 = vmatprep.mubr.f32.mxu0 0.0
  %1978 = vmatmul.mubr.f32.gmra.mrb[0].mxu0 %v1766
  %v1979 = vpop.f32.mrb[0].mxu0
  %v1980 = vadd.f32 %v1686, %v1979
  %v1981 = vpop.f32.mrb[0].mxu0
  %1982 = vmatprep.mubr.f32.mxu0 0.0
  %1983 = vmatmul.mubr.f32.gmra.mrb[0].mxu0 %v1769
  %v1984 = vpop.f32.mrb[0].mxu0
  %v1985 = vadd.f32 %v1686, %v1984
  %v1986 = vpop.f32.mrb[0].mxu0
  %1987 = vmatprep.mubr.f32.mxu0 0.0
  %1988 = vmatmul.mubr.f32.gmra.mrb[0].mxu0 %v1772
  %v1989 = vpop.f32.mrb[0].mxu0
  %v1990 = vadd.f32 %v1686, %v1989
  %v1991 = vpop.f32.mrb[0].mxu0
  %1992 = vmatprep.mubr.f32.mxu0 0.0
  %1993 = vmatmul.mubr.f32.gmra.mrb[0].mxu0 %v1775
  %v1994 = vpop.f32.mrb[0].mxu0
  %v1995 = vadd.f32 %v1686, %v1994
  %v1996 = vpop.f32.mrb[0].mxu0
  %1997 = vmatprep.mubr.f32.mxu0 0.0
  %1998 = vmatmul.mubr.f32.gmra.mrb[0].mxu0 %v1778
  %v1999 = vpop.f32.mrb[0].mxu0
  %v2000 = vadd.f32 %v1686, %v1999
  %v2001 = vpop.f32.mrb[0].mxu0
  %2002 = vmatprep.mubr.f32.mxu0 0.0
  %2003 = vmatmul.mubr.f32.gmra.mrb[0].mxu0 %v1781
  %v2004 = vpop.f32.mrb[0].mxu0
  %v2005 = vadd.f32 %v1686, %v2004
  %v2006 = vpop.f32.mrb[0].mxu0
  %2007 = vdwg.mxu0
  %2008 = vst.msk [vmem:[%s8] sm:$0xff] %vm70, %v1850
  %2009 = vst.msk [vmem:[%s8 + $0x8] sm:$0xff] %vm70, %v1855
  %2010 = vst.msk [vmem:[%s8 + $0x10] sm:$0xff] %vm70, %v1860
  %2011 = vst.msk [vmem:[%s8 + $0x18] sm:$0xff] %vm70, %v1865
  %2012 = vst.msk [vmem:[%s8 + $0x20] sm:$0xff] %vm70, %v1870
  %2013 = vst.msk [vmem:[%s8 + $0x28] sm:$0xff] %vm70, %v1875
  %2014 = vst.msk [vmem:[%s8 + $0x30] sm:$0xff] %vm70, %v1880
  %2015 = vst.msk [vmem:[%s8 + $0x38] sm:$0xff] %vm70, %v1885
  %2016 = vst.msk [vmem:[%s8 + $0x40] sm:$0xff] %vm70, %v1890
  %2017 = vst.msk [vmem:[%s8 + $0x48] sm:$0xff] %vm70, %v1895
  %2018 = vst.msk [vmem:[%s8 + $0x50] sm:$0xff] %vm70, %v1900
  %2019 = vst.msk [vmem:[%s8 + $0x58] sm:$0xff] %vm70, %v1905
  %2020 = vst.msk [vmem:[%s8 + $0x60] sm:$0xff] %vm70, %v1910
  %2021 = vst.msk [vmem:[%s8 + $0x68] sm:$0xff] %vm70, %v1915
  %2022 = vst.msk [vmem:[%s8 + $0x70] sm:$0xff] %vm70, %v1920
  %2023 = vst.msk [vmem:[%s8 + $0x78] sm:$0xff] %vm70, %v1925
  %2024 = vst.msk [vmem:[%s8 + $0x80] sm:$0xff] %vm70, %v1930
  %2025 = vst.msk [vmem:[%s8 + $0x88] sm:$0xff] %vm70, %v1935
  %2026 = vst.msk [vmem:[%s8 + $0x90] sm:$0xff] %vm70, %v1940
  %2027 = vst.msk [vmem:[%s8 + $0x98] sm:$0xff] %vm70, %v1945
  %2028 = vst.msk [vmem:[%s8 + $0xa0] sm:$0xff] %vm70, %v1950
  %2029 = vst.msk [vmem:[%s8 + $0xa8] sm:$0xff] %vm70, %v1955
  %2030 = vst.msk [vmem:[%s8 + $0xb0] sm:$0xff] %vm70, %v1960
  %2031 = vst.msk [vmem:[%s8 + $0xb8] sm:$0xff] %vm70, %v1965
  %2032 = vst.msk [vmem:[%s8 + $0xc0] sm:$0xff] %vm70, %v1970
  %2033 = vst.msk [vmem:[%s8 + $0xc8] sm:$0xff] %vm70, %v1975
  %2034 = vst.msk [vmem:[%s8 + $0xd0] sm:$0xff] %vm70, %v1980
  %2035 = vst.msk [vmem:[%s8 + $0xd8] sm:$0xff] %vm70, %v1985
  %2036 = vst.msk [vmem:[%s8 + $0xe0] sm:$0xff] %vm70, %v1990
  %2037 = vst.msk [vmem:[%s8 + $0xe8] sm:$0xff] %vm70, %v1995
  %2038 = vst.msk [vmem:[%s8 + $0xf0] sm:$0xff] %vm70, %v2000
  %2039 = vst.msk [vmem:[%s8 + $0xf8] sm:$0xff] %vm70, %v2005
  // Predicated region
  $region34: #{tpu_custom_call.1} parent=0 // pred_check
    _
  $region35: #{tpu_custom_call.1} parent=0 // pred_check_branch
    %2041 = sbr.rel (0) target = $region37
  $region36: #{tpu_custom_call.1} parent=0 // pred_region
    _
  $region37: #{tpu_custom_call.1} parent=0 // pred_fallthru
    _
  // Predicated region
  $region38: #{tpu_custom_call.1} parent=0 // pred_check
    _
  $region39: #{tpu_custom_call.1} parent=0 // pred_check_branch
    %2043 = sbr.rel (0) target = $region41
  $region40: #{tpu_custom_call.1} parent=0 // pred_region
    _
  $region41: #{tpu_custom_call.1} parent=0 // pred_fallthru
    _

</llo_original>
